<compile_context>
chip_gen: v6e
topology: v6e:2x2x1
jax: 0.10.0
libtpu: 0.0.40
codegen_flags: <defaults>
</compile_context>

<pallas_src>
import jax
import jax.numpy as jnp
from jax.experimental import pallas as pl
from jax.experimental.pallas import tpu as pltpu


def _critic_kernel(x_ref, w1_ref, b1_ref, w2_ref, b2_ref, w3_ref, b3_ref, v_ref):
    # ---- Layer 1: (TB, 4) @ (4, 1024) + b1, ReLU ----------------------------
    # K=4 is tiny; an MXU matmul would pad K to 128/256, so do it on the VPU as
    # K broadcast multiply-adds (f32 weights -> no bf16 unpack, v5e-friendly).
    # TODO(synk): if a bundle dump shows the VALU slot binding, switch this to a
    # K-padded jnp.dot on the (otherwise idle) MXU.
    x = x_ref[...]                                   # (TB, K) f32
    w1 = w1_ref[...]                                 # (K, F1) f32
    acc = x[:, 0:1] * w1[0:1, :]
    for k in range(1, w1_ref.shape[0]):
        acc = acc + x[:, k:k + 1] * w1[k:k + 1, :]
    h1 = jnp.maximum(acc + b1_ref[...], 0.0)         # (TB, F1) f32

    # ---- Layer 2: (TB, 1024) @ (1024, 512) + b2, ReLU (MXU bf16 in / f32 acc)
    h2 = jnp.dot(h1.astype(jnp.bfloat16), w2_ref[...],
                 preferred_element_type=jnp.float32) + b2_ref[...]
    h2 = jnp.maximum(h2, 0.0)                        # (TB, F2) f32

    # ---- Value head: (TB, 512) . (512,) + b3, lane-dense store --------------
    # VPU multiply + cross-lane (XLU) reduce; transpose the (TB, 1) column into
    # a (1, TB) row so the output store is lane-dense (no masked-store epilogue).
    v_col = jnp.sum(h2 * w3_ref[...], axis=-1, keepdims=True) + b3_ref[0, 0]
    v_ref[...] = v_col.T.reshape(v_ref.shape).astype(v_ref.dtype)


def _round_up(x, m):
    return ((x + m - 1) // m) * m


def _choose_tile(batch, tb_max=256):
    """Batch tile: multiple of 8, <= tb_max, and >= 2 tiles when the batch
    allows so both v7x TensorCores get work under dimension_semantics=parallel."""
    rounded = max(8, _round_up(batch, 8))
    if rounded <= 16:
        return rounded            # splitting a tiny batch is pure overhead
    return min(tb_max, _round_up((rounded + 1) // 2, 8))


def make_critic_forward(w1, b1, w2, b2, w3, b3, *, tb_max=256,
                        vmem_limit_bytes=16 << 20):
    """Pre-stage the weights once and return a jitted `state -> value` closure
    (cross-call weight residency: no per-call re-cast of ~1 MiB of weights)."""
    d_in, fc1 = w1.shape
    fc2 = w2.shape[1]

    w1f = jnp.asarray(w1, jnp.float32)                          # (d_in, fc1) f32
    w2b = jnp.asarray(w2, jnp.float32).astype(jnp.bfloat16)     # (fc1, fc2) bf16
    w3f = jnp.asarray(w3, jnp.float32).reshape(1, fc2)          # (1, fc2)  f32
    b1r = jnp.asarray(b1, jnp.float32).reshape(1, fc1)
    b2r = jnp.asarray(b2, jnp.float32).reshape(1, fc2)
    b3r = jnp.asarray(b3, jnp.float32).reshape(1, 1)            # scalar -> SMEM

    def _resident(shape):
        # Constant index_map: block is fetched once and stays VMEM-resident.
        # (pl.Buffered(1) would also drop the spare buffer, but VMEM is not the
        # binding resource at these sizes, so the default pipelining is kept.)
        return pl.BlockSpec(shape, lambda i: (0,) * len(shape))

    @jax.jit
    def forward(state):
        assert state.ndim == 2 and state.shape[1] == d_in, state.shape
        batch = state.shape[0]
        tb = _choose_tile(batch, tb_max)
        n_tiles = pl.cdiv(batch, tb)
        bp = n_tiles * tb

        x = state.astype(jnp.float32)
        if bp != batch:
            # Padded rows compute garbage (ReLU of biases) and are sliced off
            # below -- keep that invariant if refactoring.
            x = jnp.pad(x, ((0, bp - batch), (0, 0)))

        out = pl.pallas_call(
            _critic_kernel,
            out_shape=jax.ShapeDtypeStruct((n_tiles, 1, tb), jnp.float32),
            grid=(n_tiles,),
            in_specs=[
                pl.BlockSpec((tb, d_in), lambda i: (i, 0)),          # state tile
                _resident((d_in, fc1)),                              # w1 (f32)
                _resident((1, fc1)),                                 # b1 (f32)
                _resident((fc1, fc2)),                               # w2 (bf16)
                _resident((1, fc2)),                                 # b2 (f32)
                _resident((1, fc2)),                                 # w3 row (f32)
                pl.BlockSpec(memory_space=pltpu.MemorySpace.SMEM),   # b3 scalar
            ],
            out_specs=pl.BlockSpec((1, 1, tb), lambda i: (i, 0, 0)),  # lane-dense
            compiler_params=pltpu.CompilerParams(
                dimension_semantics=("parallel",),
                vmem_limit_bytes=vmem_limit_bytes,
            ),
        )(x, w1f, b1r, w2b, b2r, w3f, b3r)

        return out.reshape(bp, 1)[:batch]

    return forward


def critic_forward(state, w1, b1, w2, b2, w3, b3, **kwargs):
    """One-shot convenience wrapper; for repeated calls use make_critic_forward."""
    return make_critic_forward(w1, b1, w2, b2, w3, b3, **kwargs)(state)


def init_params(key, input_dim=4, fc1_dims=1024, fc2_dims=512):
    """nn.Linear-style U(-1/sqrt(fan_in), 1/sqrt(fan_in)) init, (in, out) layout."""
    ks = jax.random.split(key, 6)

    def linear(kw, kb, fan_in, fan_out):
        bound = 1.0 / jnp.sqrt(jnp.float32(fan_in))
        w = jax.random.uniform(kw, (fan_in, fan_out), jnp.float32, -bound, bound)
        b = jax.random.uniform(kb, (fan_out,), jnp.float32, -bound, bound)
        return w, b

    w1, b1 = linear(ks[0], ks[1], input_dim, fc1_dims)
    w2, b2 = linear(ks[2], ks[3], fc1_dims, fc2_dims)
    w3, b3 = linear(ks[4], ks[5], fc2_dims, 1)
    return w1, b1, w2, b2, w3, b3


def reference_forward(state, w1, b1, w2, b2, w3, b3):
    """Pure-JAX reference mirroring the kernel's (intentional) bf16 rounding of
    w2 only; w1/w3/biases and all accumulation are f32, as in the kernel."""
    h1 = jnp.maximum(
        jnp.dot(state, w1, precision=jax.lax.Precision.HIGHEST)
        + b1.reshape(1, -1), 0.0)
    h2 = jnp.maximum(
        jnp.dot(h1.astype(jnp.bfloat16), w2.astype(jnp.bfloat16),
                preferred_element_type=jnp.float32) + b2.reshape(1, -1), 0.0)
    return (jnp.dot(h2, w3.reshape(-1, 1), precision=jax.lax.Precision.HIGHEST)
            + b3.reshape(1, 1))


if __name__ == "__main__":
    key = jax.random.PRNGKey(0)
    k_params, k_state = jax.random.split(key)

    # input_dims=[4], fc1=1024, fc2=512 per the module; small batch of 64 gives
    # two 32-row tiles, exercising the parallel grid and the padded-slice path.
    B, D_IN = 64, 4
    params = init_params(k_params, input_dim=D_IN, fc1_dims=1024, fc2_dims=512)
    state = jax.random.normal(k_state, (B, D_IN), jnp.float32)

    forward = make_critic_forward(*params)
    v = jax.block_until_ready(forward(state))

    v_ref = reference_forward(state, *params)
    assert v.shape == (B, 1), v.shape
    max_err = float(jnp.max(jnp.abs(v - v_ref)))
    assert jnp.allclose(v, v_ref, atol=5e-3, rtol=5e-3), max_err

    print("KERNEL_OK")
</pallas_src>

<mosaic_0001>
module attributes {stable_mosaic.version = 11 : i64} {
  func.func @_critic_kernel(%arg0: i32, %arg1: memref<32x4xf32, #tpu.memory_space<vmem>>, %arg2: memref<4x1024xf32, #tpu.memory_space<vmem>>, %arg3: memref<1x1024xf32, #tpu.memory_space<vmem>>, %arg4: memref<1024x512xbf16, #tpu.memory_space<vmem>>, %arg5: memref<1x512xf32, #tpu.memory_space<vmem>>, %arg6: memref<1x512xf32, #tpu.memory_space<vmem>>, %arg7: memref<1x1xf32, #tpu.memory_space<smem>>, %arg8: memref<1x1x32xf32, #tpu.memory_space<vmem>>) attributes {dimension_semantics = [#tpu.dimension_semantics<parallel>], iteration_bounds = array<i64: 2>, scalar_prefetch = 0 : i64, scratch_operands = 0 : i64, tpu.core_type = #tpu.core_type<tc>, window_params = [{transform_indices = @transform_0, window_bounds = array<i64: 32, 4>}, {pipeline_mode = #tpu.pipeline_mode<synchronous>, transform_indices = @transform_1, window_bounds = array<i64: 4, 1024>}, {pipeline_mode = #tpu.pipeline_mode<synchronous>, transform_indices = @transform_2, window_bounds = array<i64: 1, 1024>}, {pipeline_mode = #tpu.pipeline_mode<synchronous>, transform_indices = @transform_3, window_bounds = array<i64: 1024, 512>}, {pipeline_mode = #tpu.pipeline_mode<synchronous>, transform_indices = @transform_4, window_bounds = array<i64: 1, 512>}, {pipeline_mode = #tpu.pipeline_mode<synchronous>, transform_indices = @transform_5, window_bounds = array<i64: 1, 512>}, {transform_indices = @transform_6, window_bounds = array<i64: 1, 1>}, {transform_indices = @transform_7, window_bounds = array<i64: 1, 1, 32>}]} {
    %c0 = arith.constant 0 : index
    %c0_0 = arith.constant 0 : index
    %0 = vector.load %arg1[%c0, %c0_0] : memref<32x4xf32, #tpu.memory_space<vmem>>, vector<32x4xf32>
    %c0_1 = arith.constant 0 : index
    %c0_2 = arith.constant 0 : index
    %1 = vector.load %arg2[%c0_1, %c0_2] : memref<4x1024xf32, #tpu.memory_space<vmem>>, vector<4x1024xf32>
    %2 = vector.extract_strided_slice %0 {offsets = [0, 0], sizes = [32, 1], strides = [1, 1]} : vector<32x4xf32> to vector<32x1xf32>
    %3 = vector.extract_strided_slice %1 {offsets = [0, 0], sizes = [1, 1024], strides = [1, 1]} : vector<4x1024xf32> to vector<1x1024xf32>
    %4 = vector.broadcast %2 : vector<32x1xf32> to vector<32x1024xf32>
    %5 = vector.broadcast %3 : vector<1x1024xf32> to vector<32x1024xf32>
    %6 = arith.mulf %4, %5 : vector<32x1024xf32>
    %7 = vector.extract_strided_slice %0 {offsets = [0, 1], sizes = [32, 1], strides = [1, 1]} : vector<32x4xf32> to vector<32x1xf32>
    %8 = vector.extract_strided_slice %1 {offsets = [1, 0], sizes = [1, 1024], strides = [1, 1]} : vector<4x1024xf32> to vector<1x1024xf32>
    %9 = vector.broadcast %7 : vector<32x1xf32> to vector<32x1024xf32>
    %10 = vector.broadcast %8 : vector<1x1024xf32> to vector<32x1024xf32>
    %11 = arith.mulf %9, %10 : vector<32x1024xf32>
    %12 = arith.addf %6, %11 : vector<32x1024xf32>
    %13 = vector.extract_strided_slice %0 {offsets = [0, 2], sizes = [32, 1], strides = [1, 1]} : vector<32x4xf32> to vector<32x1xf32>
    %14 = vector.extract_strided_slice %1 {offsets = [2, 0], sizes = [1, 1024], strides = [1, 1]} : vector<4x1024xf32> to vector<1x1024xf32>
    %15 = vector.broadcast %13 : vector<32x1xf32> to vector<32x1024xf32>
    %16 = vector.broadcast %14 : vector<1x1024xf32> to vector<32x1024xf32>
    %17 = arith.mulf %15, %16 : vector<32x1024xf32>
    %18 = arith.addf %12, %17 : vector<32x1024xf32>
    %19 = vector.extract_strided_slice %0 {offsets = [0, 3], sizes = [32, 1], strides = [1, 1]} : vector<32x4xf32> to vector<32x1xf32>
    %20 = vector.extract_strided_slice %1 {offsets = [3, 0], sizes = [1, 1024], strides = [1, 1]} : vector<4x1024xf32> to vector<1x1024xf32>
    %21 = vector.broadcast %19 : vector<32x1xf32> to vector<32x1024xf32>
    %22 = vector.broadcast %20 : vector<1x1024xf32> to vector<32x1024xf32>
    %23 = arith.mulf %21, %22 : vector<32x1024xf32>
    %24 = arith.addf %18, %23 : vector<32x1024xf32>
    %c0_3 = arith.constant 0 : index
    %c0_4 = arith.constant 0 : index
    %25 = vector.load %arg3[%c0_3, %c0_4] : memref<1x1024xf32, #tpu.memory_space<vmem>>, vector<1x1024xf32>
    %26 = vector.broadcast %25 : vector<1x1024xf32> to vector<32x1024xf32>
    %27 = arith.addf %24, %26 : vector<32x1024xf32>
    %cst = arith.constant 0.000000e+00 : f32
    %28 = vector.broadcast %cst : f32 to vector<32x1024xf32>
    %29 = arith.maximumf %27, %28 : vector<32x1024xf32>
    %30 = arith.truncf %29 : vector<32x1024xf32> to vector<32x1024xbf16>
    %c0_5 = arith.constant 0 : index
    %c0_6 = arith.constant 0 : index
    %31 = vector.load %arg4[%c0_5, %c0_6] : memref<1024x512xbf16, #tpu.memory_space<vmem>>, vector<1024x512xbf16>
    %cst_7 = arith.constant dense<0.000000e+00> : vector<32x512xf32>
    %32 = tpu.matmul %30, %31, %cst_7 {dimension_numbers = #tpu.dot_dimension_numbers<[1], [0], [0], [1], [0, 0, 1, 1], [], []>} : vector<32x1024xbf16>, vector<1024x512xbf16>, vector<32x512xf32> -> vector<32x512xf32>
    %c0_8 = arith.constant 0 : index
    %c0_9 = arith.constant 0 : index
    %33 = vector.load %arg5[%c0_8, %c0_9] : memref<1x512xf32, #tpu.memory_space<vmem>>, vector<1x512xf32>
    %34 = vector.broadcast %33 : vector<1x512xf32> to vector<32x512xf32>
    %35 = arith.addf %32, %34 : vector<32x512xf32>
    %cst_10 = arith.constant 0.000000e+00 : f32
    %36 = vector.broadcast %cst_10 : f32 to vector<32x512xf32>
    %37 = arith.maximumf %35, %36 : vector<32x512xf32>
    %c0_11 = arith.constant 0 : index
    %c0_12 = arith.constant 0 : index
    %38 = vector.load %arg6[%c0_11, %c0_12] : memref<1x512xf32, #tpu.memory_space<vmem>>, vector<1x512xf32>
    %39 = vector.broadcast %38 : vector<1x512xf32> to vector<32x512xf32>
    %40 = arith.mulf %37, %39 : vector<32x512xf32>
    %cst_13 = arith.constant dense<0.000000e+00> : vector<32xf32>
    %41 = vector.multi_reduction <add>, %40, %cst_13 [1] : vector<32x512xf32> to vector<32xf32>
    %42 = vector.shape_cast %41 : vector<32xf32> to vector<32x1xf32>
    %c0_14 = arith.constant 0 : index
    %c0_15 = arith.constant 0 : index
    %43 = memref.load %arg7[%c0_14, %c0_15] : memref<1x1xf32, #tpu.memory_space<smem>>
    %44 = vector.broadcast %43 : f32 to vector<32x1xf32>
    %45 = arith.addf %42, %44 : vector<32x1xf32>
    %46 = tpu.transpose %45, [1, 0] : vector<32x1xf32> -> vector<1x32xf32>
    %47 = vector.shape_cast %46 : vector<1x32xf32> to vector<1x1x32xf32>
    %c0_16 = arith.constant 0 : index
    %c0_17 = arith.constant 0 : index
    %c0_18 = arith.constant 0 : index
    %48 = vector.load %arg8[%c0_16, %c0_17, %c0_18] : memref<1x1x32xf32, #tpu.memory_space<vmem>>, vector<1x1x32xf32>
    tpu.vector_store %arg8[%c0_16, %c0_17, %c0_18], %47 {strides = array<i32>} : memref<1x1x32xf32, #tpu.memory_space<vmem>>, vector<1x1x32xf32>,
    return
  }
  func.func @transform_0(%arg0: i32) -> (i32, i32) {
    %c0_i32 = arith.constant 0 : i32
    %c0_i32_0 = arith.constant 0 : i32
    return %arg0, %c0_i32 : i32, i32
  }
  func.func @transform_1(%arg0: i32) -> (i32, i32) {
    %c0_i32 = arith.constant 0 : i32
    %c0_i32_0 = arith.constant 0 : i32
    %c0_i32_1 = arith.constant 0 : i32
    return %c0_i32, %c0_i32_0 : i32, i32
  }
  func.func @transform_2(%arg0: i32) -> (i32, i32) {
    %c0_i32 = arith.constant 0 : i32
    %c0_i32_0 = arith.constant 0 : i32
    %c0_i32_1 = arith.constant 0 : i32
    return %c0_i32, %c0_i32_0 : i32, i32
  }
  func.func @transform_3(%arg0: i32) -> (i32, i32) {
    %c0_i32 = arith.constant 0 : i32
    %c0_i32_0 = arith.constant 0 : i32
    %c0_i32_1 = arith.constant 0 : i32
    return %c0_i32, %c0_i32_0 : i32, i32
  }
  func.func @transform_4(%arg0: i32) -> (i32, i32) {
    %c0_i32 = arith.constant 0 : i32
    %c0_i32_0 = arith.constant 0 : i32
    %c0_i32_1 = arith.constant 0 : i32
    return %c0_i32, %c0_i32_0 : i32, i32
  }
  func.func @transform_5(%arg0: i32) -> (i32, i32) {
    %c0_i32 = arith.constant 0 : i32
    %c0_i32_0 = arith.constant 0 : i32
    %c0_i32_1 = arith.constant 0 : i32
    return %c0_i32, %c0_i32_0 : i32, i32
  }
  func.func @transform_6(%arg0: i32) -> (i32, i32) {
    %c0_i32 = arith.constant 0 : i32
    %c0_i32_0 = arith.constant 0 : i32
    %c0_i32_1 = arith.constant 0 : i32
    return %c0_i32, %c0_i32_0 : i32, i32
  }
  func.func @transform_7(%arg0: i32) -> (i32, i32, i32) {
    %c0_i32 = arith.constant 0 : i32
    %c0_i32_0 = arith.constant 0 : i32
    %c0_i32_1 = arith.constant 0 : i32
    return %arg0, %c0_i32, %c0_i32_0 : i32, i32, i32
  }
}

</mosaic_0001>

<llo_original>
// kernel: forward.1
$region0: #{forward.1}
  #allocation0 [shape = 'u32[]', space=smem, size = 0x4, offset = 0x4, fixed_abs, tag = 'smem constant byte address 0x4 - core index']
  #allocation1 [shape = 'u32[144,128]{1,0:T(1,128)}', space=vmem, size = 0x12000, scoped, tag = 'internal scratch']
  #allocation2 [shape = 'f32[1,1]{1,0:T(1,128)S(6)}', space=smem, size = 0x200, scoped, tag = 'scoped memory for forward.1']
  %s0 = inlined_call_operand.vmem [shape: f32[64,4], index: 0, kind: input, shape index: {}]
  %s1 = inlined_call_operand.vmem [shape: f32[4,1024], index: 1, kind: input, shape index: {}]
  %s2 = inlined_call_operand.vmem [shape: f32[1,1024], index: 2, kind: input, shape index: {}]
  %s3 = inlined_call_operand.hbm [shape: bf16[1024,512], index: 3, kind: input, shape index: {}]
  %s4 = inlined_call_operand.vmem [shape: f32[1,512], index: 4, kind: input, shape index: {}]
  %s5 = inlined_call_operand.vmem [shape: f32[1,512], index: 5, kind: input, shape index: {}]
  %s6 = inlined_call_operand.<no memory space> [shape: f32[1,1], index: 6, kind: input, shape index: {}]
  %s7 = inlined_call_operand.vmem [shape: f32[2,1,32], index: 7, kind: output, shape index: {}]
  %s8 = sld [smem:[#allocation0]]
  $region65: #{forward.1} parent=0
    _
  %s10 = ssub.s32 1, %s8
  %s11 = scalar_select 0, %s10, %s8
  %12 = sst [smem:[#allocation2]] %s6
  $region1: #{forward.1} parent=0
    #allocation3 [shape = 'u8[1048576]{0}', space=vmem, size = 0x100000, scoped, tag = 'input window, operand 3, single buffered']
    #allocation4 [shape = 's32[2]{0}', space=sflag, size = 0x8, scoped, tag = 'scoped memory for forward.1']
    %13 = vsyncpa [#allocation4], 0
    loop: start=0, step=1, limit=4
    $region2: #{forward.1} parent=1 // loop_pre_header
      _
    $region3: #{forward.1} parent=1 // loop_header
      %s15 = sphi 0, %s19
      %p16 = scmp.ge.s32.totalorder %s15, 4
      %s25 = sphi 0, %s27
      %s28 = sphi 0, %s25
      %s29 = sphi 0, %s28
      %s45 = sphi 0, %s29
      %s49 = sphi 0, %s49
      %s51 = sphi 0, %s49
      %s52 = sphi 0, %s51
      %s66 = sphi 0, %s52
      %s70 = sphi 0, %s70
      %s72 = sphi 0, %s70
      %s73 = sphi 0, %s72
      %s87 = sphi 0, %s73
      %s91 = sphi 0, %s91
      %s93 = sphi 0, %s91
      %s94 = sphi 0, %s93
      %s108 = sphi 0, %s94
      %s112 = sphi 0, %s112
      %s114 = sphi 0, %s112
      %s115 = sphi 0, %s114
      %s129 = sphi 0, %s115
      %s133 = sphi 0, %s133
      %s135 = sphi 0, %s133
      %s136 = sphi 0, %s135
      %s150 = sphi 0, %s136
      %s154 = sphi 0, %s154
      %s156 = sphi 0, %s154
      %s157 = sphi 0, %s156
      %s171 = sphi 0, %s157
      %s177 = sphi 0, %s179
      %s180 = sphi 0, %s177
      %s181 = sphi 0, %s180
      %s197 = sphi 0, %s181
    $region4: #{forward.1} parent=1 // loop_header_branch
      %18 = sbr.rel (%p16) target = $region8
    $region5: #{forward.1} parent=1 // loop_body
      %s20 = ssub.s32 %s15, 1
      %s21 = ssub.s32 %s15, 2
      %s22 = sadd.s32 %s15, 1
      %s23 = ssub.s32 %s15, %s22
      %p24 = scmp.eq.s32.totalorder %s23, 0
      %s26 = sadd.s32 %s25, 1
      %s27 = scalar_select %p24, %s25, %s26
      %p30 = pneg %p24
      %p31 = scmp.eq.s32.totalorder %s15, 1
      %p32 = por %p30, %p31
      %p33 = scmp.ne.s32.totalorder %s25, %s28
      %p34 = scmp.eq.s32.totalorder %s15, 0
      %p35 = por %p33, %p34
      %p36 = scmp.ne.s32.totalorder %s25, %s28
      %p37 = scmp.eq.s32.totalorder %s20, 1
      %p38 = por %p36, %p37
      %p39 = scmp.ne.s32.totalorder %s28, %s29
      %p40 = scmp.eq.s32.totalorder %s20, 0
      %p41 = por %p39, %p40
      %p42 = scmp.ne.s32.totalorder %s28, %s29
      %p43 = scmp.eq.s32.totalorder %s21, 1
      %p44 = por %p42, %p43
      %p46 = scmp.ne.s32.totalorder %s29, %s45
      %p47 = scmp.eq.s32.totalorder %s21, 0
      %p48 = por %p46, %p47
      %s50 = sadd.s32 %s49, 1
      %p53 = scmp.eq.s32.totalorder %s15, 1
      %p54 = scmp.ne.s32.totalorder %s49, %s51
      %p55 = scmp.eq.s32.totalorder %s15, 0
      %p56 = por %p54, %p55
      %p57 = scmp.ne.s32.totalorder %s49, %s51
      %p58 = scmp.eq.s32.totalorder %s20, 1
      %p59 = por %p57, %p58
      %p60 = scmp.ne.s32.totalorder %s51, %s52
      %p61 = scmp.eq.s32.totalorder %s20, 0
      %p62 = por %p60, %p61
      %p63 = scmp.ne.s32.totalorder %s51, %s52
      %p64 = scmp.eq.s32.totalorder %s21, 1
      %p65 = por %p63, %p64
      %p67 = scmp.ne.s32.totalorder %s52, %s66
      %p68 = scmp.eq.s32.totalorder %s21, 0
      %p69 = por %p67, %p68
      %s71 = sadd.s32 %s70, 1
      %p74 = scmp.eq.s32.totalorder %s15, 1
      %p75 = scmp.ne.s32.totalorder %s70, %s72
      %p76 = scmp.eq.s32.totalorder %s15, 0
      %p77 = por %p75, %p76
      %p78 = scmp.ne.s32.totalorder %s70, %s72
      %p79 = scmp.eq.s32.totalorder %s20, 1
      %p80 = por %p78, %p79
      %p81 = scmp.ne.s32.totalorder %s72, %s73
      %p82 = scmp.eq.s32.totalorder %s20, 0
      %p83 = por %p81, %p82
      %p84 = scmp.ne.s32.totalorder %s72, %s73
      %p85 = scmp.eq.s32.totalorder %s21, 1
      %p86 = por %p84, %p85
      %p88 = scmp.ne.s32.totalorder %s73, %s87
      %p89 = scmp.eq.s32.totalorder %s21, 0
      %p90 = por %p88, %p89
      %s92 = sadd.s32 %s91, 1
      %p95 = scmp.eq.s32.totalorder %s15, 1
      %p96 = scmp.ne.s32.totalorder %s91, %s93
      %p97 = scmp.eq.s32.totalorder %s15, 0
      %p98 = por %p96, %p97
      %p99 = scmp.ne.s32.totalorder %s91, %s93
      %p100 = scmp.eq.s32.totalorder %s20, 1
      %p101 = por %p99, %p100
      %p102 = scmp.ne.s32.totalorder %s93, %s94
      %p103 = scmp.eq.s32.totalorder %s20, 0
      %p104 = por %p102, %p103
      %p105 = scmp.ne.s32.totalorder %s93, %s94
      %p106 = scmp.eq.s32.totalorder %s21, 1
      %p107 = por %p105, %p106
      %p109 = scmp.ne.s32.totalorder %s94, %s108
      %p110 = scmp.eq.s32.totalorder %s21, 0
      %p111 = por %p109, %p110
      %s113 = sadd.s32 %s112, 1
      %p116 = scmp.eq.s32.totalorder %s15, 1
      %p117 = scmp.ne.s32.totalorder %s112, %s114
      %p118 = scmp.eq.s32.totalorder %s15, 0
      %p119 = por %p117, %p118
      %p120 = scmp.ne.s32.totalorder %s112, %s114
      %p121 = scmp.eq.s32.totalorder %s20, 1
      %p122 = por %p120, %p121
      %p123 = scmp.ne.s32.totalorder %s114, %s115
      %p124 = scmp.eq.s32.totalorder %s20, 0
      %p125 = por %p123, %p124
      %p126 = scmp.ne.s32.totalorder %s114, %s115
      %p127 = scmp.eq.s32.totalorder %s21, 1
      %p128 = por %p126, %p127
      %p130 = scmp.ne.s32.totalorder %s115, %s129
      %p131 = scmp.eq.s32.totalorder %s21, 0
      %p132 = por %p130, %p131
      %s134 = sadd.s32 %s133, 1
      %p137 = scmp.eq.s32.totalorder %s15, 1
      %p138 = scmp.ne.s32.totalorder %s133, %s135
      %p139 = scmp.eq.s32.totalorder %s15, 0
      %p140 = por %p138, %p139
      %p141 = scmp.ne.s32.totalorder %s133, %s135
      %p142 = scmp.eq.s32.totalorder %s20, 1
      %p143 = por %p141, %p142
      %p144 = scmp.ne.s32.totalorder %s135, %s136
      %p145 = scmp.eq.s32.totalorder %s20, 0
      %p146 = por %p144, %p145
      %p147 = scmp.ne.s32.totalorder %s135, %s136
      %p148 = scmp.eq.s32.totalorder %s21, 1
      %p149 = por %p147, %p148
      %p151 = scmp.ne.s32.totalorder %s136, %s150
      %p152 = scmp.eq.s32.totalorder %s21, 0
      %p153 = por %p151, %p152
      %s155 = sadd.s32 %s154, 1
      %p158 = scmp.eq.s32.totalorder %s15, 1
      %p159 = scmp.ne.s32.totalorder %s154, %s156
      %p160 = scmp.eq.s32.totalorder %s15, 0
      %p161 = por %p159, %p160
      %p162 = scmp.ne.s32.totalorder %s154, %s156
      %p163 = scmp.eq.s32.totalorder %s20, 1
      %p164 = por %p162, %p163
      %p165 = scmp.ne.s32.totalorder %s156, %s157
      %p166 = scmp.eq.s32.totalorder %s20, 0
      %p167 = por %p165, %p166
      %p168 = scmp.ne.s32.totalorder %s156, %s157
      %p169 = scmp.eq.s32.totalorder %s21, 1
      %p170 = por %p168, %p169
      %p172 = scmp.ne.s32.totalorder %s157, %s171
      %p173 = scmp.eq.s32.totalorder %s21, 0
      %p174 = por %p172, %p173
      %s175 = ssub.s32 %s15, %s22
      %p176 = scmp.eq.s32.totalorder %s175, 0
      %s178 = sadd.s32 %s177, 1
      %s179 = scalar_select %p176, %s177, %s178
      %p182 = pneg %p176
      %p183 = scmp.eq.s32.totalorder %s15, 1
      %p184 = por %p182, %p183
      %p185 = scmp.ne.s32.totalorder %s177, %s180
      %p186 = scmp.eq.s32.totalorder %s15, 0
      %p187 = por %p185, %p186
      %p188 = scmp.ne.s32.totalorder %s177, %s180
      %p189 = scmp.eq.s32.totalorder %s20, 1
      %p190 = por %p188, %p189
      %p191 = scmp.ne.s32.totalorder %s180, %s181
      %p192 = scmp.eq.s32.totalorder %s20, 0
      %p193 = por %p191, %p192
      %p194 = scmp.ne.s32.totalorder %s180, %s181
      %p195 = scmp.eq.s32.totalorder %s21, 1
      %p196 = por %p194, %p195
      %p198 = scmp.ne.s32.totalorder %s181, %s197
      %p199 = scmp.eq.s32.totalorder %s21, 0
      %p200 = por %p198, %p199
      %p201 = scmp.le.s32.totalorder 1, %s15
      %p202 = scmp.lt.s32.totalorder %s15, 3
      %p203 = pnand %p201, %p202
      %p204 = pneg %p203
      // Predicated region
      $region9: #{forward.1} parent=5 // pred_check
        _
      $region10: #{forward.1} parent=5 // pred_check_branch
        %206 = sbr.rel (%p203) target = $region12
      $region11: #{forward.1} parent=5 // pred_region
        %s207 = ssub.s32 %s15, 1
        // Predicated region
        $region13: #{forward.1} parent=11 // pred_check
          %p208 = pneg %p62
        $region14: #{forward.1} parent=11 // pred_check_branch
          %210 = sbr.rel (%p208) target = $region16
        $region15: #{forward.1} parent=11 // pred_region
          _
        $region16: #{forward.1} parent=11 // pred_fallthru
          _
        // Predicated region
        $region17: #{forward.1} parent=11 // pred_check
          %p211 = pneg %p83
        $region18: #{forward.1} parent=11 // pred_check_branch
          %213 = sbr.rel (%p211) target = $region20
        $region19: #{forward.1} parent=11 // pred_region
          _
        $region20: #{forward.1} parent=11 // pred_fallthru
          _
        // Predicated region
        $region21: #{forward.1} parent=11 // pred_check
          %p214 = pneg %p104
        $region22: #{forward.1} parent=11 // pred_check_branch
          %216 = sbr.rel (%p214) target = $region24
        $region23: #{forward.1} parent=11 // pred_region
          %s218 = ssub.s32 32768, 32768
          %219 = vsyncadd [#allocation4], %s218
          %s220 = sshll.u32 [#allocation3], 4
          %s221 = int_to_ptr.vmem [resolvable:$true] %s220
          %226 = dma.hbm_to_vmem [thread:$0]  %s3, 32768, %s221, [#allocation4], 256, 256, 16
        $region24: #{forward.1} parent=11 // pred_fallthru
          _
        // Predicated region
        $region25: #{forward.1} parent=11 // pred_check
          %p227 = pneg %p125
        $region26: #{forward.1} parent=11 // pred_check_branch
          %229 = sbr.rel (%p227) target = $region28
        $region27: #{forward.1} parent=11 // pred_region
          _
        $region28: #{forward.1} parent=11 // pred_fallthru
          _
        // Predicated region
        $region29: #{forward.1} parent=11 // pred_check
          %p230 = pneg %p146
        $region30: #{forward.1} parent=11 // pred_check_branch
          %232 = sbr.rel (%p230) target = $region32
        $region31: #{forward.1} parent=11 // pred_region
          _
        $region32: #{forward.1} parent=11 // pred_fallthru
          _
        // Predicated region
        $region33: #{forward.1} parent=11 // pred_check
          %p233 = pneg %p167
        $region34: #{forward.1} parent=11 // pred_check_branch
          %235 = sbr.rel (%p233) target = $region36
        $region35: #{forward.1} parent=11 // pred_region
          _
        $region36: #{forward.1} parent=11 // pred_fallthru
          _
      $region12: #{forward.1} parent=5 // pred_fallthru
        _
      %p236 = scmp.lt.s32.totalorder %s15, 2
      // Predicated region
      $region37: #{forward.1} parent=5 // pred_check
        %p237 = pneg %p236
      $region38: #{forward.1} parent=5 // pred_check_branch
        %239 = sbr.rel (%p237) target = $region40
      $region39: #{forward.1} parent=5 // pred_region
        // Predicated region
        $region41: #{forward.1} parent=39 // pred_check
          %p240 = pneg %p35
        $region42: #{forward.1} parent=39 // pred_check_branch
          %242 = sbr.rel (%p240) target = $region44
        $region43: #{forward.1} parent=39 // pred_region
          %s243 = smul.u32 4, %s15
          %p244 = scmp.lt.s32.totalorder %s243, 7
          %s245 = scalar_select %p244, %s243, 7
          %s246 = smul.addr %s245, 8
          %s247 = scalar_lea.vmem %s0, %s246
          %s248 = smul.u32 4, %s15
        $region44: #{forward.1} parent=39 // pred_fallthru
          _
      $region40: #{forward.1} parent=5 // pred_fallthru
        _
      %p249 = scmp.le.s32.totalorder 1, %s15
      %p250 = scmp.lt.s32.totalorder %s15, 3
      %p251 = pnand %p249, %p250
      %p252 = pneg %p251
      // Predicated region
      $region45: #{forward.1} parent=5 // pred_check
        _
      $region46: #{forward.1} parent=5 // pred_check_branch
        %254 = sbr.rel (%p251) target = $region48
      $region47: #{forward.1} parent=5 // pred_region
        %s255 = ssub.s32 %s15, 1
        // Predicated region
        $region49: #{forward.1} parent=47 // pred_check
          %p256 = pneg %p104
        $region50: #{forward.1} parent=47 // pred_check_branch
          %258 = sbr.rel (%p256) target = $region52
        $region51: #{forward.1} parent=47 // pred_region
          %259 = dma.done [#allocation4], 32768
        $region52: #{forward.1} parent=47 // pred_fallthru
          _
        %s260 = smul.u32 4, %s20
        %p261 = scmp.lt.s32.totalorder %s260, 7
        %s262 = scalar_select %p261, %s260, 7
        %s263 = smul.addr %s262, 8
        %s264 = scalar_lea.vmem %s0, %s263
        %p265 = pneg %p41
        %p266 = pneg %p38
        %p267 = pneg %p62
        %p268 = pneg %p59
        %p269 = pneg %p83
        %p270 = pneg %p80
        %p271 = pneg %p104
        %p272 = pneg %p101
        %p273 = pneg %p125
        %p274 = pneg %p122
        %p275 = pneg %p146
        %p276 = pneg %p143
        %p277 = pneg %p167
        %p278 = pneg %p164
        %p279 = pneg %p193
        %p280 = pneg %p190
        %p281 = scmp.lt.s32.totalorder %s20, 1
        %s282 = scalar_select %p281, %s20, 1
        %s283 = scalar_lea.vmem %s7, %s282
        %s284 = smul.u32 4, %s20
        %p285 = scmp.lt.s32.totalorder %s284, 7
        %s286 = scalar_select %p285, %s284, 7
        %s287 = smul.addr %s286, 8
        %s288 = scalar_lea.vmem %s0, %s287
        %s289 = smul.u32 4, %s20
        %p290 = scmp.lt.s32.totalorder %s20, 1
        %s291 = scalar_select %p290, %s20, 1
        %s292 = scalar_lea.vmem %s7, %s291
        %v293 = vld [vmem:[%s288] sm:$0xff]
        %v294 = vld [vmem:[%s288 + $0x8] sm:$0xff]
        %v295 = vld [vmem:[%s288 + $0x10] sm:$0xff]
        %v296 = vld [vmem:[%s288 + $0x18] sm:$0xff]
        %v297 = vld [vmem:[%s1] sm:$0xff]
        %v298 = vld [vmem:[%s1 + $0x8] sm:$0xff]
        %v299 = vld [vmem:[%s1 + $0x10] sm:$0xff]
        %v300 = vld [vmem:[%s1 + $0x18] sm:$0xff]
        %302 = vset.pattern.permute.xlu0 0
        %303 = vperm.xlu0 %302, %v293
        %v304 = vpop.permute.xlu0 %303
        %307 = vset.pattern.permute.xlu0 0
        %308 = vperm.xlu0 %307, %v294
        %v309 = vpop.permute.xlu0 %308
        %312 = vset.pattern.permute.xlu0 0
        %313 = vperm.xlu0 %312, %v295
        %v314 = vpop.permute.xlu0 %313
        %317 = vset.pattern.permute.xlu0 0
        %318 = vperm.xlu0 %317, %v296
        %v319 = vpop.permute.xlu0 %318
        %v325 = vlaneseq
        %v326 = vshrl.u32 %v325, 7
        %v327 = vsub.s32 0, %v326
        %v328 = vrot.slane %v297, %v327
        %v329 = vlaneseq
        %v330 = vshrl.u32 %v329, 7
        %v331 = vsub.s32 4, %v330
        %v332 = vrot.slane %v297, %v331
        %v333 = vlaneseq
        %v334 = vshrl.u32 %v333, 7
        %v335 = vsub.s32 0, %v334
        %v336 = vrot.slane %v298, %v335
        %v337 = vlaneseq
        %v338 = vshrl.u32 %v337, 7
        %v339 = vsub.s32 4, %v338
        %v340 = vrot.slane %v298, %v339
        %v341 = vlaneseq
        %v342 = vshrl.u32 %v341, 7
        %v343 = vsub.s32 0, %v342
        %v344 = vrot.slane %v299, %v343
        %v345 = vlaneseq
        %v346 = vshrl.u32 %v345, 7
        %v347 = vsub.s32 4, %v346
        %v348 = vrot.slane %v299, %v347
        %v349 = vlaneseq
        %v350 = vshrl.u32 %v349, 7
        %v351 = vsub.s32 0, %v350
        %v352 = vrot.slane %v300, %v351
        %v353 = vlaneseq
        %v354 = vshrl.u32 %v353, 7
        %v355 = vsub.s32 4, %v354
        %v356 = vrot.slane %v300, %v355
        %v365 = vlaneseq
        %v366 = vshrl.u32 %v365, 7
        %v367 = vsub.s32 0, %v366
        %v368 = vrot.slane %v328, %v367
        %v369 = vlaneseq
        %v370 = vshrl.u32 %v369, 7
        %v371 = vsub.s32 0, %v370
        %v372 = vrot.slane %v332, %v371
        %v373 = vlaneseq
        %v374 = vshrl.u32 %v373, 7
        %v375 = vsub.s32 0, %v374
        %v376 = vrot.slane %v336, %v375
        %v377 = vlaneseq
        %v378 = vshrl.u32 %v377, 7
        %v379 = vsub.s32 0, %v378
        %v380 = vrot.slane %v340, %v379
        %v381 = vlaneseq
        %v382 = vshrl.u32 %v381, 7
        %v383 = vsub.s32 0, %v382
        %v384 = vrot.slane %v344, %v383
        %v385 = vlaneseq
        %v386 = vshrl.u32 %v385, 7
        %v387 = vsub.s32 0, %v386
        %v388 = vrot.slane %v348, %v387
        %v389 = vlaneseq
        %v390 = vshrl.u32 %v389, 7
        %v391 = vsub.s32 0, %v390
        %v392 = vrot.slane %v352, %v391
        %v393 = vlaneseq
        %v394 = vshrl.u32 %v393, 7
        %v395 = vsub.s32 0, %v394
        %v396 = vrot.slane %v356, %v395
        %v397 = vmul.f32 %v304, %v368
        %v398 = vmul.f32 %v304, %v372
        %v399 = vmul.f32 %v304, %v376
        %v400 = vmul.f32 %v304, %v380
        %v401 = vmul.f32 %v304, %v384
        %v402 = vmul.f32 %v304, %v388
        %v403 = vmul.f32 %v304, %v392
        %v404 = vmul.f32 %v304, %v396
        %v405 = vmul.f32 %v309, %v368
        %v406 = vmul.f32 %v309, %v372
        %v407 = vmul.f32 %v309, %v376
        %v408 = vmul.f32 %v309, %v380
        %v409 = vmul.f32 %v309, %v384
        %v410 = vmul.f32 %v309, %v388
        %v411 = vmul.f32 %v309, %v392
        %v412 = vmul.f32 %v309, %v396
        %v413 = vmul.f32 %v314, %v368
        %v414 = vmul.f32 %v314, %v372
        %v415 = vmul.f32 %v314, %v376
        %v416 = vmul.f32 %v314, %v380
        %v417 = vmul.f32 %v314, %v384
        %v418 = vmul.f32 %v314, %v388
        %v419 = vmul.f32 %v314, %v392
        %v420 = vmul.f32 %v314, %v396
        %v421 = vmul.f32 %v319, %v368
        %v422 = vmul.f32 %v319, %v372
        %v423 = vmul.f32 %v319, %v376
        %v424 = vmul.f32 %v319, %v380
        %v425 = vmul.f32 %v319, %v384
        %v426 = vmul.f32 %v319, %v388
        %v427 = vmul.f32 %v319, %v392
        %v428 = vmul.f32 %v319, %v396
        %429 = vset.pattern.permute.xlu0 1
        %430 = vperm.xlu0 %429, %v293
        %v431 = vpop.permute.xlu0 %430
        %433 = vset.pattern.permute.xlu0 1
        %434 = vperm.xlu0 %433, %v294
        %v435 = vpop.permute.xlu0 %434
        %437 = vset.pattern.permute.xlu0 1
        %438 = vperm.xlu0 %437, %v295
        %v439 = vpop.permute.xlu0 %438
        %441 = vset.pattern.permute.xlu0 1
        %442 = vperm.xlu0 %441, %v296
        %v443 = vpop.permute.xlu0 %442
        %v445 = vlaneseq
        %v446 = vshrl.u32 %v445, 7
        %v447 = vsub.s32 1, %v446
        %v448 = vrot.slane %v297, %v447
        %v449 = vlaneseq
        %v450 = vshrl.u32 %v449, 7
        %v451 = vsub.s32 5, %v450
        %v452 = vrot.slane %v297, %v451
        %v453 = vlaneseq
        %v454 = vshrl.u32 %v453, 7
        %v455 = vsub.s32 1, %v454
        %v456 = vrot.slane %v298, %v455
        %v457 = vlaneseq
        %v458 = vshrl.u32 %v457, 7
        %v459 = vsub.s32 5, %v458
        %v460 = vrot.slane %v298, %v459
        %v461 = vlaneseq
        %v462 = vshrl.u32 %v461, 7
        %v463 = vsub.s32 1, %v462
        %v464 = vrot.slane %v299, %v463
        %v465 = vlaneseq
        %v466 = vshrl.u32 %v465, 7
        %v467 = vsub.s32 5, %v466
        %v468 = vrot.slane %v299, %v467
        %v469 = vlaneseq
        %v470 = vshrl.u32 %v469, 7
        %v471 = vsub.s32 1, %v470
        %v472 = vrot.slane %v300, %v471
        %v473 = vlaneseq
        %v474 = vshrl.u32 %v473, 7
        %v475 = vsub.s32 5, %v474
        %v476 = vrot.slane %v300, %v475
        %v485 = vlaneseq
        %v486 = vshrl.u32 %v485, 7
        %v487 = vsub.s32 1, %v486
        %v488 = vrot.slane %v448, %v487
        %v489 = vlaneseq
        %v490 = vshrl.u32 %v489, 7
        %v491 = vsub.s32 1, %v490
        %v492 = vrot.slane %v452, %v491
        %v493 = vlaneseq
        %v494 = vshrl.u32 %v493, 7
        %v495 = vsub.s32 1, %v494
        %v496 = vrot.slane %v456, %v495
        %v497 = vlaneseq
        %v498 = vshrl.u32 %v497, 7
        %v499 = vsub.s32 1, %v498
        %v500 = vrot.slane %v460, %v499
        %v501 = vlaneseq
        %v502 = vshrl.u32 %v501, 7
        %v503 = vsub.s32 1, %v502
        %v504 = vrot.slane %v464, %v503
        %v505 = vlaneseq
        %v506 = vshrl.u32 %v505, 7
        %v507 = vsub.s32 1, %v506
        %v508 = vrot.slane %v468, %v507
        %v509 = vlaneseq
        %v510 = vshrl.u32 %v509, 7
        %v511 = vsub.s32 1, %v510
        %v512 = vrot.slane %v472, %v511
        %v513 = vlaneseq
        %v514 = vshrl.u32 %v513, 7
        %v515 = vsub.s32 1, %v514
        %v516 = vrot.slane %v476, %v515
        %v517 = vmul.f32 %v431, %v488
        %v518 = vmul.f32 %v431, %v492
        %v519 = vmul.f32 %v431, %v496
        %v520 = vmul.f32 %v431, %v500
        %v521 = vmul.f32 %v431, %v504
        %v522 = vmul.f32 %v431, %v508
        %v523 = vmul.f32 %v431, %v512
        %v524 = vmul.f32 %v431, %v516
        %v525 = vmul.f32 %v435, %v488
        %v526 = vmul.f32 %v435, %v492
        %v527 = vmul.f32 %v435, %v496
        %v528 = vmul.f32 %v435, %v500
        %v529 = vmul.f32 %v435, %v504
        %v530 = vmul.f32 %v435, %v508
        %v531 = vmul.f32 %v435, %v512
        %v532 = vmul.f32 %v435, %v516
        %v533 = vmul.f32 %v439, %v488
        %v534 = vmul.f32 %v439, %v492
        %v535 = vmul.f32 %v439, %v496
        %v536 = vmul.f32 %v439, %v500
        %v537 = vmul.f32 %v439, %v504
        %v538 = vmul.f32 %v439, %v508
        %v539 = vmul.f32 %v439, %v512
        %v540 = vmul.f32 %v439, %v516
        %v541 = vmul.f32 %v443, %v488
        %v542 = vmul.f32 %v443, %v492
        %v543 = vmul.f32 %v443, %v496
        %v544 = vmul.f32 %v443, %v500
        %v545 = vmul.f32 %v443, %v504
        %v546 = vmul.f32 %v443, %v508
        %v547 = vmul.f32 %v443, %v512
        %v548 = vmul.f32 %v443, %v516
        %v549 = vadd.f32 %v397, %v517
        %v550 = vadd.f32 %v398, %v518
        %v551 = vadd.f32 %v399, %v519
        %v552 = vadd.f32 %v400, %v520
        %v553 = vadd.f32 %v401, %v521
        %v554 = vadd.f32 %v402, %v522
        %v555 = vadd.f32 %v403, %v523
        %v556 = vadd.f32 %v404, %v524
        %v557 = vadd.f32 %v405, %v525
        %v558 = vadd.f32 %v406, %v526
        %v559 = vadd.f32 %v407, %v527
        %v560 = vadd.f32 %v408, %v528
        %v561 = vadd.f32 %v409, %v529
        %v562 = vadd.f32 %v410, %v530
        %v563 = vadd.f32 %v411, %v531
        %v564 = vadd.f32 %v412, %v532
        %v565 = vadd.f32 %v413, %v533
        %v566 = vadd.f32 %v414, %v534
        %v567 = vadd.f32 %v415, %v535
        %v568 = vadd.f32 %v416, %v536
        %v569 = vadd.f32 %v417, %v537
        %v570 = vadd.f32 %v418, %v538
        %v571 = vadd.f32 %v419, %v539
        %v572 = vadd.f32 %v420, %v540
        %v573 = vadd.f32 %v421, %v541
        %v574 = vadd.f32 %v422, %v542
        %v575 = vadd.f32 %v423, %v543
        %v576 = vadd.f32 %v424, %v544
        %v577 = vadd.f32 %v425, %v545
        %v578 = vadd.f32 %v426, %v546
        %v579 = vadd.f32 %v427, %v547
        %v580 = vadd.f32 %v428, %v548
        %581 = vset.pattern.permute.xlu0 2
        %582 = vperm.xlu0 %581, %v293
        %v583 = vpop.permute.xlu0 %582
        %585 = vset.pattern.permute.xlu0 2
        %586 = vperm.xlu0 %585, %v294
        %v587 = vpop.permute.xlu0 %586
        %589 = vset.pattern.permute.xlu0 2
        %590 = vperm.xlu0 %589, %v295
        %v591 = vpop.permute.xlu0 %590
        %593 = vset.pattern.permute.xlu0 2
        %594 = vperm.xlu0 %593, %v296
        %v595 = vpop.permute.xlu0 %594
        %v597 = vlaneseq
        %v598 = vshrl.u32 %v597, 7
        %v599 = vsub.s32 2, %v598
        %v600 = vrot.slane %v297, %v599
        %v601 = vlaneseq
        %v602 = vshrl.u32 %v601, 7
        %v603 = vsub.s32 6, %v602
        %v604 = vrot.slane %v297, %v603
        %v605 = vlaneseq
        %v606 = vshrl.u32 %v605, 7
        %v607 = vsub.s32 2, %v606
        %v608 = vrot.slane %v298, %v607
        %v609 = vlaneseq
        %v610 = vshrl.u32 %v609, 7
        %v611 = vsub.s32 6, %v610
        %v612 = vrot.slane %v298, %v611
        %v613 = vlaneseq
        %v614 = vshrl.u32 %v613, 7
        %v615 = vsub.s32 2, %v614
        %v616 = vrot.slane %v299, %v615
        %v617 = vlaneseq
        %v618 = vshrl.u32 %v617, 7
        %v619 = vsub.s32 6, %v618
        %v620 = vrot.slane %v299, %v619
        %v621 = vlaneseq
        %v622 = vshrl.u32 %v621, 7
        %v623 = vsub.s32 2, %v622
        %v624 = vrot.slane %v300, %v623
        %v625 = vlaneseq
        %v626 = vshrl.u32 %v625, 7
        %v627 = vsub.s32 6, %v626
        %v628 = vrot.slane %v300, %v627
        %v637 = vlaneseq
        %v638 = vshrl.u32 %v637, 7
        %v639 = vsub.s32 2, %v638
        %v640 = vrot.slane %v600, %v639
        %v641 = vlaneseq
        %v642 = vshrl.u32 %v641, 7
        %v643 = vsub.s32 2, %v642
        %v644 = vrot.slane %v604, %v643
        %v645 = vlaneseq
        %v646 = vshrl.u32 %v645, 7
        %v647 = vsub.s32 2, %v646
        %v648 = vrot.slane %v608, %v647
        %v649 = vlaneseq
        %v650 = vshrl.u32 %v649, 7
        %v651 = vsub.s32 2, %v650
        %v652 = vrot.slane %v612, %v651
        %v653 = vlaneseq
        %v654 = vshrl.u32 %v653, 7
        %v655 = vsub.s32 2, %v654
        %v656 = vrot.slane %v616, %v655
        %v657 = vlaneseq
        %v658 = vshrl.u32 %v657, 7
        %v659 = vsub.s32 2, %v658
        %v660 = vrot.slane %v620, %v659
        %v661 = vlaneseq
        %v662 = vshrl.u32 %v661, 7
        %v663 = vsub.s32 2, %v662
        %v664 = vrot.slane %v624, %v663
        %v665 = vlaneseq
        %v666 = vshrl.u32 %v665, 7
        %v667 = vsub.s32 2, %v666
        %v668 = vrot.slane %v628, %v667
        %v669 = vmul.f32 %v583, %v640
        %v670 = vmul.f32 %v583, %v644
        %v671 = vmul.f32 %v583, %v648
        %v672 = vmul.f32 %v583, %v652
        %v673 = vmul.f32 %v583, %v656
        %v674 = vmul.f32 %v583, %v660
        %v675 = vmul.f32 %v583, %v664
        %v676 = vmul.f32 %v583, %v668
        %v677 = vmul.f32 %v587, %v640
        %v678 = vmul.f32 %v587, %v644
        %v679 = vmul.f32 %v587, %v648
        %v680 = vmul.f32 %v587, %v652
        %v681 = vmul.f32 %v587, %v656
        %v682 = vmul.f32 %v587, %v660
        %v683 = vmul.f32 %v587, %v664
        %v684 = vmul.f32 %v587, %v668
        %v685 = vmul.f32 %v591, %v640
        %v686 = vmul.f32 %v591, %v644
        %v687 = vmul.f32 %v591, %v648
        %v688 = vmul.f32 %v591, %v652
        %v689 = vmul.f32 %v591, %v656
        %v690 = vmul.f32 %v591, %v660
        %v691 = vmul.f32 %v591, %v664
        %v692 = vmul.f32 %v591, %v668
        %v693 = vmul.f32 %v595, %v640
        %v694 = vmul.f32 %v595, %v644
        %v695 = vmul.f32 %v595, %v648
        %v696 = vmul.f32 %v595, %v652
        %v697 = vmul.f32 %v595, %v656
        %v698 = vmul.f32 %v595, %v660
        %v699 = vmul.f32 %v595, %v664
        %v700 = vmul.f32 %v595, %v668
        %v701 = vadd.f32 %v549, %v669
        %v702 = vadd.f32 %v550, %v670
        %v703 = vadd.f32 %v551, %v671
        %v704 = vadd.f32 %v552, %v672
        %v705 = vadd.f32 %v553, %v673
        %v706 = vadd.f32 %v554, %v674
        %v707 = vadd.f32 %v555, %v675
        %v708 = vadd.f32 %v556, %v676
        %v709 = vadd.f32 %v557, %v677
        %v710 = vadd.f32 %v558, %v678
        %v711 = vadd.f32 %v559, %v679
        %v712 = vadd.f32 %v560, %v680
        %v713 = vadd.f32 %v561, %v681
        %v714 = vadd.f32 %v562, %v682
        %v715 = vadd.f32 %v563, %v683
        %v716 = vadd.f32 %v564, %v684
        %v717 = vadd.f32 %v565, %v685
        %v718 = vadd.f32 %v566, %v686
        %v719 = vadd.f32 %v567, %v687
        %v720 = vadd.f32 %v568, %v688
        %v721 = vadd.f32 %v569, %v689
        %v722 = vadd.f32 %v570, %v690
        %v723 = vadd.f32 %v571, %v691
        %v724 = vadd.f32 %v572, %v692
        %v725 = vadd.f32 %v573, %v693
        %v726 = vadd.f32 %v574, %v694
        %v727 = vadd.f32 %v575, %v695
        %v728 = vadd.f32 %v576, %v696
        %v729 = vadd.f32 %v577, %v697
        %v730 = vadd.f32 %v578, %v698
        %v731 = vadd.f32 %v579, %v699
        %v732 = vadd.f32 %v580, %v700
        %733 = vset.pattern.permute.xlu0 3
        %734 = vperm.xlu0 %733, %v293
        %v735 = vpop.permute.xlu0 %734
        %737 = vset.pattern.permute.xlu0 3
        %738 = vperm.xlu0 %737, %v294
        %v739 = vpop.permute.xlu0 %738
        %741 = vset.pattern.permute.xlu0 3
        %742 = vperm.xlu0 %741, %v295
        %v743 = vpop.permute.xlu0 %742
        %745 = vset.pattern.permute.xlu0 3
        %746 = vperm.xlu0 %745, %v296
        %v747 = vpop.permute.xlu0 %746
        %v749 = vlaneseq
        %v750 = vshrl.u32 %v749, 7
        %v751 = vsub.s32 3, %v750
        %v752 = vrot.slane %v297, %v751
        %v753 = vlaneseq
        %v754 = vshrl.u32 %v753, 7
        %v755 = vsub.s32 7, %v754
        %v756 = vrot.slane %v297, %v755
        %v757 = vlaneseq
        %v758 = vshrl.u32 %v757, 7
        %v759 = vsub.s32 3, %v758
        %v760 = vrot.slane %v298, %v759
        %v761 = vlaneseq
        %v762 = vshrl.u32 %v761, 7
        %v763 = vsub.s32 7, %v762
        %v764 = vrot.slane %v298, %v763
        %v765 = vlaneseq
        %v766 = vshrl.u32 %v765, 7
        %v767 = vsub.s32 3, %v766
        %v768 = vrot.slane %v299, %v767
        %v769 = vlaneseq
        %v770 = vshrl.u32 %v769, 7
        %v771 = vsub.s32 7, %v770
        %v772 = vrot.slane %v299, %v771
        %v773 = vlaneseq
        %v774 = vshrl.u32 %v773, 7
        %v775 = vsub.s32 3, %v774
        %v776 = vrot.slane %v300, %v775
        %v777 = vlaneseq
        %v778 = vshrl.u32 %v777, 7
        %v779 = vsub.s32 7, %v778
        %v780 = vrot.slane %v300, %v779
        %v789 = vlaneseq
        %v790 = vshrl.u32 %v789, 7
        %v791 = vsub.s32 3, %v790
        %v792 = vrot.slane %v752, %v791
        %v793 = vlaneseq
        %v794 = vshrl.u32 %v793, 7
        %v795 = vsub.s32 3, %v794
        %v796 = vrot.slane %v756, %v795
        %v797 = vlaneseq
        %v798 = vshrl.u32 %v797, 7
        %v799 = vsub.s32 3, %v798
        %v800 = vrot.slane %v760, %v799
        %v801 = vlaneseq
        %v802 = vshrl.u32 %v801, 7
        %v803 = vsub.s32 3, %v802
        %v804 = vrot.slane %v764, %v803
        %v805 = vlaneseq
        %v806 = vshrl.u32 %v805, 7
        %v807 = vsub.s32 3, %v806
        %v808 = vrot.slane %v768, %v807
        %v809 = vlaneseq
        %v810 = vshrl.u32 %v809, 7
        %v811 = vsub.s32 3, %v810
        %v812 = vrot.slane %v772, %v811
        %v813 = vlaneseq
        %v814 = vshrl.u32 %v813, 7
        %v815 = vsub.s32 3, %v814
        %v816 = vrot.slane %v776, %v815
        %v817 = vlaneseq
        %v818 = vshrl.u32 %v817, 7
        %v819 = vsub.s32 3, %v818
        %v820 = vrot.slane %v780, %v819
        %v821 = vmul.f32 %v735, %v792
        %v822 = vmul.f32 %v735, %v796
        %v823 = vmul.f32 %v735, %v800
        %v824 = vmul.f32 %v735, %v804
        %v825 = vmul.f32 %v735, %v808
        %v826 = vmul.f32 %v735, %v812
        %v827 = vmul.f32 %v735, %v816
        %v828 = vmul.f32 %v735, %v820
        %v829 = vmul.f32 %v739, %v792
        %v830 = vmul.f32 %v739, %v796
        %v831 = vmul.f32 %v739, %v800
        %v832 = vmul.f32 %v739, %v804
        %v833 = vmul.f32 %v739, %v808
        %v834 = vmul.f32 %v739, %v812
        %v835 = vmul.f32 %v739, %v816
        %v836 = vmul.f32 %v739, %v820
        %v837 = vmul.f32 %v743, %v792
        %v838 = vmul.f32 %v743, %v796
        %v839 = vmul.f32 %v743, %v800
        %v840 = vmul.f32 %v743, %v804
        %v841 = vmul.f32 %v743, %v808
        %v842 = vmul.f32 %v743, %v812
        %v843 = vmul.f32 %v743, %v816
        %v844 = vmul.f32 %v743, %v820
        %v845 = vmul.f32 %v747, %v792
        %v846 = vmul.f32 %v747, %v796
        %v847 = vmul.f32 %v747, %v800
        %v848 = vmul.f32 %v747, %v804
        %v849 = vmul.f32 %v747, %v808
        %v850 = vmul.f32 %v747, %v812
        %v851 = vmul.f32 %v747, %v816
        %v852 = vmul.f32 %v747, %v820
        %v853 = vadd.f32 %v701, %v821
        %v854 = vadd.f32 %v702, %v822
        %v855 = vadd.f32 %v703, %v823
        %v856 = vadd.f32 %v704, %v824
        %v857 = vadd.f32 %v705, %v825
        %v858 = vadd.f32 %v706, %v826
        %v859 = vadd.f32 %v707, %v827
        %v860 = vadd.f32 %v708, %v828
        %v861 = vadd.f32 %v709, %v829
        %v862 = vadd.f32 %v710, %v830
        %v863 = vadd.f32 %v711, %v831
        %v864 = vadd.f32 %v712, %v832
        %v865 = vadd.f32 %v713, %v833
        %v866 = vadd.f32 %v714, %v834
        %v867 = vadd.f32 %v715, %v835
        %v868 = vadd.f32 %v716, %v836
        %v869 = vadd.f32 %v717, %v837
        %v870 = vadd.f32 %v718, %v838
        %v871 = vadd.f32 %v719, %v839
        %v872 = vadd.f32 %v720, %v840
        %v873 = vadd.f32 %v721, %v841
        %v874 = vadd.f32 %v722, %v842
        %v875 = vadd.f32 %v723, %v843
        %v876 = vadd.f32 %v724, %v844
        %v877 = vadd.f32 %v725, %v845
        %v878 = vadd.f32 %v726, %v846
        %v879 = vadd.f32 %v727, %v847
        %v880 = vadd.f32 %v728, %v848
        %v881 = vadd.f32 %v729, %v849
        %v882 = vadd.f32 %v730, %v850
        %v883 = vadd.f32 %v731, %v851
        %v884 = vadd.f32 %v732, %v852
        %v885 = vld [vmem:[%s2] sm:$0xff]
        %v887 = vlaneseq
        %v888 = vshrl.u32 %v887, 7
        %v889 = vsub.s32 0, %v888
        %v890 = vrot.slane %v885, %v889
        %v891 = vlaneseq
        %v892 = vshrl.u32 %v891, 7
        %v893 = vsub.s32 1, %v892
        %v894 = vrot.slane %v885, %v893
        %v895 = vlaneseq
        %v896 = vshrl.u32 %v895, 7
        %v897 = vsub.s32 2, %v896
        %v898 = vrot.slane %v885, %v897
        %v899 = vlaneseq
        %v900 = vshrl.u32 %v899, 7
        %v901 = vsub.s32 3, %v900
        %v902 = vrot.slane %v885, %v901
        %v903 = vlaneseq
        %v904 = vshrl.u32 %v903, 7
        %v905 = vsub.s32 4, %v904
        %v906 = vrot.slane %v885, %v905
        %v907 = vlaneseq
        %v908 = vshrl.u32 %v907, 7
        %v909 = vsub.s32 5, %v908
        %v910 = vrot.slane %v885, %v909
        %v911 = vlaneseq
        %v912 = vshrl.u32 %v911, 7
        %v913 = vsub.s32 6, %v912
        %v914 = vrot.slane %v885, %v913
        %v915 = vlaneseq
        %v916 = vshrl.u32 %v915, 7
        %v917 = vsub.s32 7, %v916
        %v918 = vrot.slane %v885, %v917
        %v927 = vadd.f32 %v853, %v890
        %v928 = vadd.f32 %v854, %v894
        %v929 = vadd.f32 %v855, %v898
        %v930 = vadd.f32 %v856, %v902
        %v931 = vadd.f32 %v857, %v906
        %v932 = vadd.f32 %v858, %v910
        %v933 = vadd.f32 %v859, %v914
        %v934 = vadd.f32 %v860, %v918
        %v935 = vadd.f32 %v861, %v890
        %v936 = vadd.f32 %v862, %v894
        %v937 = vadd.f32 %v863, %v898
        %v938 = vadd.f32 %v864, %v902
        %v939 = vadd.f32 %v865, %v906
        %v940 = vadd.f32 %v866, %v910
        %v941 = vadd.f32 %v867, %v914
        %v942 = vadd.f32 %v868, %v918
        %v943 = vadd.f32 %v869, %v890
        %v944 = vadd.f32 %v870, %v894
        %v945 = vadd.f32 %v871, %v898
        %v946 = vadd.f32 %v872, %v902
        %v947 = vadd.f32 %v873, %v906
        %v948 = vadd.f32 %v874, %v910
        %v949 = vadd.f32 %v875, %v914
        %v950 = vadd.f32 %v876, %v918
        %v951 = vadd.f32 %v877, %v890
        %v952 = vadd.f32 %v878, %v894
        %v953 = vadd.f32 %v879, %v898
        %v954 = vadd.f32 %v880, %v902
        %v955 = vadd.f32 %v881, %v906
        %v956 = vadd.f32 %v882, %v910
        %v957 = vadd.f32 %v883, %v914
        %v958 = vadd.f32 %v884, %v918
        %v959 = vmax.f32 %v927, 0.0
        %v960 = vmax.f32 %v928, 0.0
        %v961 = vmax.f32 %v929, 0.0
        %v962 = vmax.f32 %v930, 0.0
        %v963 = vmax.f32 %v931, 0.0
        %v964 = vmax.f32 %v932, 0.0
        %v965 = vmax.f32 %v933, 0.0
        %v966 = vmax.f32 %v934, 0.0
        %v967 = vmax.f32 %v935, 0.0
        %v968 = vmax.f32 %v936, 0.0
        %v969 = vmax.f32 %v937, 0.0
        %v970 = vmax.f32 %v938, 0.0
        %v971 = vmax.f32 %v939, 0.0
        %v972 = vmax.f32 %v940, 0.0
        %v973 = vmax.f32 %v941, 0.0
        %v974 = vmax.f32 %v942, 0.0
        %v975 = vmax.f32 %v943, 0.0
        %v976 = vmax.f32 %v944, 0.0
        %v977 = vmax.f32 %v945, 0.0
        %v978 = vmax.f32 %v946, 0.0
        %v979 = vmax.f32 %v947, 0.0
        %v980 = vmax.f32 %v948, 0.0
        %v981 = vmax.f32 %v949, 0.0
        %v982 = vmax.f32 %v950, 0.0
        %v983 = vmax.f32 %v951, 0.0
        %v984 = vmax.f32 %v952, 0.0
        %v985 = vmax.f32 %v953, 0.0
        %v986 = vmax.f32 %v954, 0.0
        %v987 = vmax.f32 %v955, 0.0
        %v988 = vmax.f32 %v956, 0.0
        %v989 = vmax.f32 %v957, 0.0
        %v990 = vmax.f32 %v958, 0.0
        %v991 = vpack.c.bf16 %v967, %v959
        %v992 = vpack.c.bf16 %v968, %v960
        %v993 = vpack.c.bf16 %v969, %v961
        %v994 = vpack.c.bf16 %v970, %v962
        %v995 = vpack.c.bf16 %v971, %v963
        %v996 = vpack.c.bf16 %v972, %v964
        %v997 = vpack.c.bf16 %v973, %v965
        %v998 = vpack.c.bf16 %v974, %v966
        %v999 = vpack.c.bf16 %v983, %v975
        %v1000 = vpack.c.bf16 %v984, %v976
        %v1001 = vpack.c.bf16 %v985, %v977
        %v1002 = vpack.c.bf16 %v986, %v978
        %v1003 = vpack.c.bf16 %v987, %v979
        %v1004 = vpack.c.bf16 %v988, %v980
        %v1005 = vpack.c.bf16 %v989, %v981
        %v1006 = vpack.c.bf16 %v990, %v982
        %v1007 = vld [vmem:[#allocation3] sm:$0xff]
        %v1008 = vld [vmem:[#allocation3 + $0x8] sm:$0xff]
        %v1009 = vld [vmem:[#allocation3 + $0x10] sm:$0xff]
        %v1010 = vld [vmem:[#allocation3 + $0x18] sm:$0xff]
        %v1011 = vld [vmem:[#allocation3 + $0x20] sm:$0xff]
        %v1012 = vld [vmem:[#allocation3 + $0x28] sm:$0xff]
        %v1013 = vld [vmem:[#allocation3 + $0x30] sm:$0xff]
        %v1014 = vld [vmem:[#allocation3 + $0x38] sm:$0xff]
        %v1015 = vld [vmem:[#allocation3 + $0x40] sm:$0xff]
        %v1016 = vld [vmem:[#allocation3 + $0x48] sm:$0xff]
        %v1017 = vld [vmem:[#allocation3 + $0x50] sm:$0xff]
        %v1018 = vld [vmem:[#allocation3 + $0x58] sm:$0xff]
        %v1019 = vld [vmem:[#allocation3 + $0x60] sm:$0xff]
        %v1020 = vld [vmem:[#allocation3 + $0x68] sm:$0xff]
        %v1021 = vld [vmem:[#allocation3 + $0x70] sm:$0xff]
        %v1022 = vld [vmem:[#allocation3 + $0x78] sm:$0xff]
        %v1023 = vld [vmem:[#allocation3 + $0x80] sm:$0xff]
        %v1024 = vld [vmem:[#allocation3 + $0x88] sm:$0xff]
        %v1025 = vld [vmem:[#allocation3 + $0x90] sm:$0xff]
        %v1026 = vld [vmem:[#allocation3 + $0x98] sm:$0xff]
        %v1027 = vld [vmem:[#allocation3 + $0xa0] sm:$0xff]
        %v1028 = vld [vmem:[#allocation3 + $0xa8] sm:$0xff]
        %v1029 = vld [vmem:[#allocation3 + $0xb0] sm:$0xff]
        %v1030 = vld [vmem:[#allocation3 + $0xb8] sm:$0xff]
        %v1031 = vld [vmem:[#allocation3 + $0xc0] sm:$0xff]
        %v1032 = vld [vmem:[#allocation3 + $0xc8] sm:$0xff]
        %v1033 = vld [vmem:[#allocation3 + $0xd0] sm:$0xff]
        %v1034 = vld [vmem:[#allocation3 + $0xd8] sm:$0xff]
        %v1035 = vld [vmem:[#allocation3 + $0xe0] sm:$0xff]
        %v1036 = vld [vmem:[#allocation3 + $0xe8] sm:$0xff]
        %v1037 = vld [vmem:[#allocation3 + $0xf0] sm:$0xff]
        %v1038 = vld [vmem:[#allocation3 + $0xf8] sm:$0xff]
        %v1039 = vld [vmem:[#allocation3 + $0x100] sm:$0xff]
        %v1040 = vld [vmem:[#allocation3 + $0x108] sm:$0xff]
        %v1041 = vld [vmem:[#allocation3 + $0x110] sm:$0xff]
        %v1042 = vld [vmem:[#allocation3 + $0x118] sm:$0xff]
        %v1043 = vld [vmem:[#allocation3 + $0x120] sm:$0xff]
        %v1044 = vld [vmem:[#allocation3 + $0x128] sm:$0xff]
        %v1045 = vld [vmem:[#allocation3 + $0x130] sm:$0xff]
        %v1046 = vld [vmem:[#allocation3 + $0x138] sm:$0xff]
        %v1047 = vld [vmem:[#allocation3 + $0x140] sm:$0xff]
        %v1048 = vld [vmem:[#allocation3 + $0x148] sm:$0xff]
        %v1049 = vld [vmem:[#allocation3 + $0x150] sm:$0xff]
        %v1050 = vld [vmem:[#allocation3 + $0x158] sm:$0xff]
        %v1051 = vld [vmem:[#allocation3 + $0x160] sm:$0xff]
        %v1052 = vld [vmem:[#allocation3 + $0x168] sm:$0xff]
        %v1053 = vld [vmem:[#allocation3 + $0x170] sm:$0xff]
        %v1054 = vld [vmem:[#allocation3 + $0x178] sm:$0xff]
        %v1055 = vld [vmem:[#allocation3 + $0x180] sm:$0xff]
        %v1056 = vld [vmem:[#allocation3 + $0x188] sm:$0xff]
        %v1057 = vld [vmem:[#allocation3 + $0x190] sm:$0xff]
        %v1058 = vld [vmem:[#allocation3 + $0x198] sm:$0xff]
        %v1059 = vld [vmem:[#allocation3 + $0x1a0] sm:$0xff]
        %v1060 = vld [vmem:[#allocation3 + $0x1a8] sm:$0xff]
        %v1061 = vld [vmem:[#allocation3 + $0x1b0] sm:$0xff]
        %v1062 = vld [vmem:[#allocation3 + $0x1b8] sm:$0xff]
        %v1063 = vld [vmem:[#allocation3 + $0x1c0] sm:$0xff]
        %v1064 = vld [vmem:[#allocation3 + $0x1c8] sm:$0xff]
        %v1065 = vld [vmem:[#allocation3 + $0x1d0] sm:$0xff]
        %v1066 = vld [vmem:[#allocation3 + $0x1d8] sm:$0xff]
        %v1067 = vld [vmem:[#allocation3 + $0x1e0] sm:$0xff]
        %v1068 = vld [vmem:[#allocation3 + $0x1e8] sm:$0xff]
        %v1069 = vld [vmem:[#allocation3 + $0x1f0] sm:$0xff]
        %v1070 = vld [vmem:[#allocation3 + $0x1f8] sm:$0xff]
        %v1071 = vld [vmem:[#allocation3 + $0x200] sm:$0xff]
        %v1072 = vld [vmem:[#allocation3 + $0x208] sm:$0xff]
        %v1073 = vld [vmem:[#allocation3 + $0x210] sm:$0xff]
        %v1074 = vld [vmem:[#allocation3 + $0x218] sm:$0xff]
        %v1075 = vld [vmem:[#allocation3 + $0x220] sm:$0xff]
        %v1076 = vld [vmem:[#allocation3 + $0x228] sm:$0xff]
        %v1077 = vld [vmem:[#allocation3 + $0x230] sm:$0xff]
        %v1078 = vld [vmem:[#allocation3 + $0x238] sm:$0xff]
        %v1079 = vld [vmem:[#allocation3 + $0x240] sm:$0xff]
        %v1080 = vld [vmem:[#allocation3 + $0x248] sm:$0xff]
        %v1081 = vld [vmem:[#allocation3 + $0x250] sm:$0xff]
        %v1082 = vld [vmem:[#allocation3 + $0x258] sm:$0xff]
        %v1083 = vld [vmem:[#allocation3 + $0x260] sm:$0xff]
        %v1084 = vld [vmem:[#allocation3 + $0x268] sm:$0xff]
        %v1085 = vld [vmem:[#allocation3 + $0x270] sm:$0xff]
        %v1086 = vld [vmem:[#allocation3 + $0x278] sm:$0xff]
        %v1087 = vld [vmem:[#allocation3 + $0x280] sm:$0xff]
        %v1088 = vld [vmem:[#allocation3 + $0x288] sm:$0xff]
        %v1089 = vld [vmem:[#allocation3 + $0x290] sm:$0xff]
        %v1090 = vld [vmem:[#allocation3 + $0x298] sm:$0xff]
        %v1091 = vld [vmem:[#allocation3 + $0x2a0] sm:$0xff]
        %v1092 = vld [vmem:[#allocation3 + $0x2a8] sm:$0xff]
        %v1093 = vld [vmem:[#allocation3 + $0x2b0] sm:$0xff]
        %v1094 = vld [vmem:[#allocation3 + $0x2b8] sm:$0xff]
        %v1095 = vld [vmem:[#allocation3 + $0x2c0] sm:$0xff]
        %v1096 = vld [vmem:[#allocation3 + $0x2c8] sm:$0xff]
        %v1097 = vld [vmem:[#allocation3 + $0x2d0] sm:$0xff]
        %v1098 = vld [vmem:[#allocation3 + $0x2d8] sm:$0xff]
        %v1099 = vld [vmem:[#allocation3 + $0x2e0] sm:$0xff]
        %v1100 = vld [vmem:[#allocation3 + $0x2e8] sm:$0xff]
        %v1101 = vld [vmem:[#allocation3 + $0x2f0] sm:$0xff]
        %v1102 = vld [vmem:[#allocation3 + $0x2f8] sm:$0xff]
        %v1103 = vld [vmem:[#allocation3 + $0x300] sm:$0xff]
        %v1104 = vld [vmem:[#allocation3 + $0x308] sm:$0xff]
        %v1105 = vld [vmem:[#allocation3 + $0x310] sm:$0xff]
        %v1106 = vld [vmem:[#allocation3 + $0x318] sm:$0xff]
        %v1107 = vld [vmem:[#allocation3 + $0x320] sm:$0xff]
        %v1108 = vld [vmem:[#allocation3 + $0x328] sm:$0xff]
        %v1109 = vld [vmem:[#allocation3 + $0x330] sm:$0xff]
        %v1110 = vld [vmem:[#allocation3 + $0x338] sm:$0xff]
        %v1111 = vld [vmem:[#allocation3 + $0x340] sm:$0xff]
        %v1112 = vld [vmem:[#allocation3 + $0x348] sm:$0xff]
        %v1113 = vld [vmem:[#allocation3 + $0x350] sm:$0xff]
        %v1114 = vld [vmem:[#allocation3 + $0x358] sm:$0xff]
        %v1115 = vld [vmem:[#allocation3 + $0x360] sm:$0xff]
        %v1116 = vld [vmem:[#allocation3 + $0x368] sm:$0xff]
        %v1117 = vld [vmem:[#allocation3 + $0x370] sm:$0xff]
        %v1118 = vld [vmem:[#allocation3 + $0x378] sm:$0xff]
        %v1119 = vld [vmem:[#allocation3 + $0x380] sm:$0xff]
        %v1120 = vld [vmem:[#allocation3 + $0x388] sm:$0xff]
        %v1121 = vld [vmem:[#allocation3 + $0x390] sm:$0xff]
        %v1122 = vld [vmem:[#allocation3 + $0x398] sm:$0xff]
        %v1123 = vld [vmem:[#allocation3 + $0x3a0] sm:$0xff]
        %v1124 = vld [vmem:[#allocation3 + $0x3a8] sm:$0xff]
        %v1125 = vld [vmem:[#allocation3 + $0x3b0] sm:$0xff]
        %v1126 = vld [vmem:[#allocation3 + $0x3b8] sm:$0xff]
        %v1127 = vld [vmem:[#allocation3 + $0x3c0] sm:$0xff]
        %v1128 = vld [vmem:[#allocation3 + $0x3c8] sm:$0xff]
        %v1129 = vld [vmem:[#allocation3 + $0x3d0] sm:$0xff]
        %v1130 = vld [vmem:[#allocation3 + $0x3d8] sm:$0xff]
        %v1131 = vld [vmem:[#allocation3 + $0x3e0] sm:$0xff]
        %v1132 = vld [vmem:[#allocation3 + $0x3e8] sm:$0xff]
        %v1133 = vld [vmem:[#allocation3 + $0x3f0] sm:$0xff]
        %v1134 = vld [vmem:[#allocation3 + $0x3f8] sm:$0xff]
        %v1135 = vld [vmem:[#allocation3 + $0x400] sm:$0xff]
        %v1136 = vld [vmem:[#allocation3 + $0x408] sm:$0xff]
        %v1137 = vld [vmem:[#allocation3 + $0x410] sm:$0xff]
        %v1138 = vld [vmem:[#allocation3 + $0x418] sm:$0xff]
        %v1139 = vld [vmem:[#allocation3 + $0x420] sm:$0xff]
        %v1140 = vld [vmem:[#allocation3 + $0x428] sm:$0xff]
        %v1141 = vld [vmem:[#allocation3 + $0x430] sm:$0xff]
        %v1142 = vld [vmem:[#allocation3 + $0x438] sm:$0xff]
        %v1143 = vld [vmem:[#allocation3 + $0x440] sm:$0xff]
        %v1144 = vld [vmem:[#allocation3 + $0x448] sm:$0xff]
        %v1145 = vld [vmem:[#allocation3 + $0x450] sm:$0xff]
        %v1146 = vld [vmem:[#allocation3 + $0x458] sm:$0xff]
        %v1147 = vld [vmem:[#allocation3 + $0x460] sm:$0xff]
        %v1148 = vld [vmem:[#allocation3 + $0x468] sm:$0xff]
        %v1149 = vld [vmem:[#allocation3 + $0x470] sm:$0xff]
        %v1150 = vld [vmem:[#allocation3 + $0x478] sm:$0xff]
        %v1151 = vld [vmem:[#allocation3 + $0x480] sm:$0xff]
        %v1152 = vld [vmem:[#allocation3 + $0x488] sm:$0xff]
        %v1153 = vld [vmem:[#allocation3 + $0x490] sm:$0xff]
        %v1154 = vld [vmem:[#allocation3 + $0x498] sm:$0xff]
        %v1155 = vld [vmem:[#allocation3 + $0x4a0] sm:$0xff]
        %v1156 = vld [vmem:[#allocation3 + $0x4a8] sm:$0xff]
        %v1157 = vld [vmem:[#allocation3 + $0x4b0] sm:$0xff]
        %v1158 = vld [vmem:[#allocation3 + $0x4b8] sm:$0xff]
        %v1159 = vld [vmem:[#allocation3 + $0x4c0] sm:$0xff]
        %v1160 = vld [vmem:[#allocation3 + $0x4c8] sm:$0xff]
        %v1161 = vld [vmem:[#allocation3 + $0x4d0] sm:$0xff]
        %v1162 = vld [vmem:[#allocation3 + $0x4d8] sm:$0xff]
        %v1163 = vld [vmem:[#allocation3 + $0x4e0] sm:$0xff]
        %v1164 = vld [vmem:[#allocation3 + $0x4e8] sm:$0xff]
        %v1165 = vld [vmem:[#allocation3 + $0x4f0] sm:$0xff]
        %v1166 = vld [vmem:[#allocation3 + $0x4f8] sm:$0xff]
        %v1167 = vld [vmem:[#allocation3 + $0x500] sm:$0xff]
        %v1168 = vld [vmem:[#allocation3 + $0x508] sm:$0xff]
        %v1169 = vld [vmem:[#allocation3 + $0x510] sm:$0xff]
        %v1170 = vld [vmem:[#allocation3 + $0x518] sm:$0xff]
        %v1171 = vld [vmem:[#allocation3 + $0x520] sm:$0xff]
        %v1172 = vld [vmem:[#allocation3 + $0x528] sm:$0xff]
        %v1173 = vld [vmem:[#allocation3 + $0x530] sm:$0xff]
        %v1174 = vld [vmem:[#allocation3 + $0x538] sm:$0xff]
        %v1175 = vld [vmem:[#allocation3 + $0x540] sm:$0xff]
        %v1176 = vld [vmem:[#allocation3 + $0x548] sm:$0xff]
        %v1177 = vld [vmem:[#allocation3 + $0x550] sm:$0xff]
        %v1178 = vld [vmem:[#allocation3 + $0x558] sm:$0xff]
        %v1179 = vld [vmem:[#allocation3 + $0x560] sm:$0xff]
        %v1180 = vld [vmem:[#allocation3 + $0x568] sm:$0xff]
        %v1181 = vld [vmem:[#allocation3 + $0x570] sm:$0xff]
        %v1182 = vld [vmem:[#allocation3 + $0x578] sm:$0xff]
        %v1183 = vld [vmem:[#allocation3 + $0x580] sm:$0xff]
        %v1184 = vld [vmem:[#allocation3 + $0x588] sm:$0xff]
        %v1185 = vld [vmem:[#allocation3 + $0x590] sm:$0xff]
        %v1186 = vld [vmem:[#allocation3 + $0x598] sm:$0xff]
        %v1187 = vld [vmem:[#allocation3 + $0x5a0] sm:$0xff]
        %v1188 = vld [vmem:[#allocation3 + $0x5a8] sm:$0xff]
        %v1189 = vld [vmem:[#allocation3 + $0x5b0] sm:$0xff]
        %v1190 = vld [vmem:[#allocation3 + $0x5b8] sm:$0xff]
        %v1191 = vld [vmem:[#allocation3 + $0x5c0] sm:$0xff]
        %v1192 = vld [vmem:[#allocation3 + $0x5c8] sm:$0xff]
        %v1193 = vld [vmem:[#allocation3 + $0x5d0] sm:$0xff]
        %v1194 = vld [vmem:[#allocation3 + $0x5d8] sm:$0xff]
        %v1195 = vld [vmem:[#allocation3 + $0x5e0] sm:$0xff]
        %v1196 = vld [vmem:[#allocation3 + $0x5e8] sm:$0xff]
        %v1197 = vld [vmem:[#allocation3 + $0x5f0] sm:$0xff]
        %v1198 = vld [vmem:[#allocation3 + $0x5f8] sm:$0xff]
        %v1199 = vld [vmem:[#allocation3 + $0x600] sm:$0xff]
        %v1200 = vld [vmem:[#allocation3 + $0x608] sm:$0xff]
        %v1201 = vld [vmem:[#allocation3 + $0x610] sm:$0xff]
        %v1202 = vld [vmem:[#allocation3 + $0x618] sm:$0xff]
        %v1203 = vld [vmem:[#allocation3 + $0x620] sm:$0xff]
        %v1204 = vld [vmem:[#allocation3 + $0x628] sm:$0xff]
        %v1205 = vld [vmem:[#allocation3 + $0x630] sm:$0xff]
        %v1206 = vld [vmem:[#allocation3 + $0x638] sm:$0xff]
        %v1207 = vld [vmem:[#allocation3 + $0x640] sm:$0xff]
        %v1208 = vld [vmem:[#allocation3 + $0x648] sm:$0xff]
        %v1209 = vld [vmem:[#allocation3 + $0x650] sm:$0xff]
        %v1210 = vld [vmem:[#allocation3 + $0x658] sm:$0xff]
        %v1211 = vld [vmem:[#allocation3 + $0x660] sm:$0xff]
        %v1212 = vld [vmem:[#allocation3 + $0x668] sm:$0xff]
        %v1213 = vld [vmem:[#allocation3 + $0x670] sm:$0xff]
        %v1214 = vld [vmem:[#allocation3 + $0x678] sm:$0xff]
        %v1215 = vld [vmem:[#allocation3 + $0x680] sm:$0xff]
        %v1216 = vld [vmem:[#allocation3 + $0x688] sm:$0xff]
        %v1217 = vld [vmem:[#allocation3 + $0x690] sm:$0xff]
        %v1218 = vld [vmem:[#allocation3 + $0x698] sm:$0xff]
        %v1219 = vld [vmem:[#allocation3 + $0x6a0] sm:$0xff]
        %v1220 = vld [vmem:[#allocation3 + $0x6a8] sm:$0xff]
        %v1221 = vld [vmem:[#allocation3 + $0x6b0] sm:$0xff]
        %v1222 = vld [vmem:[#allocation3 + $0x6b8] sm:$0xff]
        %v1223 = vld [vmem:[#allocation3 + $0x6c0] sm:$0xff]
        %v1224 = vld [vmem:[#allocation3 + $0x6c8] sm:$0xff]
        %v1225 = vld [vmem:[#allocation3 + $0x6d0] sm:$0xff]
        %v1226 = vld [vmem:[#allocation3 + $0x6d8] sm:$0xff]
        %v1227 = vld [vmem:[#allocation3 + $0x6e0] sm:$0xff]
        %v1228 = vld [vmem:[#allocation3 + $0x6e8] sm:$0xff]
        %v1229 = vld [vmem:[#allocation3 + $0x6f0] sm:$0xff]
        %v1230 = vld [vmem:[#allocation3 + $0x6f8] sm:$0xff]
        %v1231 = vld [vmem:[#allocation3 + $0x700] sm:$0xff]
        %v1232 = vld [vmem:[#allocation3 + $0x708] sm:$0xff]
        %v1233 = vld [vmem:[#allocation3 + $0x710] sm:$0xff]
        %v1234 = vld [vmem:[#allocation3 + $0x718] sm:$0xff]
        %v1235 = vld [vmem:[#allocation3 + $0x720] sm:$0xff]
        %v1236 = vld [vmem:[#allocation3 + $0x728] sm:$0xff]
        %v1237 = vld [vmem:[#allocation3 + $0x730] sm:$0xff]
        %v1238 = vld [vmem:[#allocation3 + $0x738] sm:$0xff]
        %v1239 = vld [vmem:[#allocation3 + $0x740] sm:$0xff]
        %v1240 = vld [vmem:[#allocation3 + $0x748] sm:$0xff]
        %v1241 = vld [vmem:[#allocation3 + $0x750] sm:$0xff]
        %v1242 = vld [vmem:[#allocation3 + $0x758] sm:$0xff]
        %v1243 = vld [vmem:[#allocation3 + $0x760] sm:$0xff]
        %v1244 = vld [vmem:[#allocation3 + $0x768] sm:$0xff]
        %v1245 = vld [vmem:[#allocation3 + $0x770] sm:$0xff]
        %v1246 = vld [vmem:[#allocation3 + $0x778] sm:$0xff]
        %v1247 = vld [vmem:[#allocation3 + $0x780] sm:$0xff]
        %v1248 = vld [vmem:[#allocation3 + $0x788] sm:$0xff]
        %v1249 = vld [vmem:[#allocation3 + $0x790] sm:$0xff]
        %v1250 = vld [vmem:[#allocation3 + $0x798] sm:$0xff]
        %v1251 = vld [vmem:[#allocation3 + $0x7a0] sm:$0xff]
        %v1252 = vld [vmem:[#allocation3 + $0x7a8] sm:$0xff]
        %v1253 = vld [vmem:[#allocation3 + $0x7b0] sm:$0xff]
        %v1254 = vld [vmem:[#allocation3 + $0x7b8] sm:$0xff]
        %v1255 = vld [vmem:[#allocation3 + $0x7c0] sm:$0xff]
        %v1256 = vld [vmem:[#allocation3 + $0x7c8] sm:$0xff]
        %v1257 = vld [vmem:[#allocation3 + $0x7d0] sm:$0xff]
        %v1258 = vld [vmem:[#allocation3 + $0x7d8] sm:$0xff]
        %v1259 = vld [vmem:[#allocation3 + $0x7e0] sm:$0xff]
        %v1260 = vld [vmem:[#allocation3 + $0x7e8] sm:$0xff]
        %v1261 = vld [vmem:[#allocation3 + $0x7f0] sm:$0xff]
        %v1262 = vld [vmem:[#allocation3 + $0x7f8] sm:$0xff]
        %v1263 = vld [vmem:[%s4] sm:$0xf]
        %v1265 = vlaneseq
        %v1266 = vshrl.u32 %v1265, 7
        %v1267 = vsub.s32 0, %v1266
        %v1268 = vrot.slane %v1263, %v1267
        %v1269 = vlaneseq
        %v1270 = vshrl.u32 %v1269, 7
        %v1271 = vsub.s32 1, %v1270
        %v1272 = vrot.slane %v1263, %v1271
        %v1273 = vlaneseq
        %v1274 = vshrl.u32 %v1273, 7
        %v1275 = vsub.s32 2, %v1274
        %v1276 = vrot.slane %v1263, %v1275
        %v1277 = vlaneseq
        %v1278 = vshrl.u32 %v1277, 7
        %v1279 = vsub.s32 3, %v1278
        %v1280 = vrot.slane %v1263, %v1279
        %v1541 = vunpack.c.l.b16 %v1007
        %v1542 = vunpack.c.h.b16 %v1007
        %v1543 = vunpack.c.l.b16 %v1008
        %v1544 = vunpack.c.h.b16 %v1008
        %v1545 = vunpack.c.l.b16 %v1009
        %v1546 = vunpack.c.h.b16 %v1009
        %v1547 = vunpack.c.l.b16 %v1010
        %v1548 = vunpack.c.h.b16 %v1010
        %v1549 = vunpack.c.l.b16 %v1011
        %v1550 = vunpack.c.h.b16 %v1011
        %v1551 = vunpack.c.l.b16 %v1012
        %v1552 = vunpack.c.h.b16 %v1012
        %v1553 = vunpack.c.l.b16 %v1013
        %v1554 = vunpack.c.h.b16 %v1013
        %v1555 = vunpack.c.l.b16 %v1014
        %v1556 = vunpack.c.h.b16 %v1014
        %v1557 = vunpack.c.l.b16 %v1015
        %v1558 = vunpack.c.h.b16 %v1015
        %v1559 = vunpack.c.l.b16 %v1016
        %v1560 = vunpack.c.h.b16 %v1016
        %v1561 = vunpack.c.l.b16 %v1017
        %v1562 = vunpack.c.h.b16 %v1017
        %v1563 = vunpack.c.l.b16 %v1018
        %v1564 = vunpack.c.h.b16 %v1018
        %v1565 = vunpack.c.l.b16 %v1019
        %v1566 = vunpack.c.h.b16 %v1019
        %v1567 = vunpack.c.l.b16 %v1020
        %v1568 = vunpack.c.h.b16 %v1020
        %v1569 = vunpack.c.l.b16 %v1021
        %v1570 = vunpack.c.h.b16 %v1021
        %v1571 = vunpack.c.l.b16 %v1022
        %v1572 = vunpack.c.h.b16 %v1022
        %v1573 = vunpack.c.l.b16 %v1023
        %v1574 = vunpack.c.h.b16 %v1023
        %v1575 = vunpack.c.l.b16 %v1024
        %v1576 = vunpack.c.h.b16 %v1024
        %v1577 = vunpack.c.l.b16 %v1025
        %v1578 = vunpack.c.h.b16 %v1025
        %v1579 = vunpack.c.l.b16 %v1026
        %v1580 = vunpack.c.h.b16 %v1026
        %v1581 = vunpack.c.l.b16 %v1027
        %v1582 = vunpack.c.h.b16 %v1027
        %v1583 = vunpack.c.l.b16 %v1028
        %v1584 = vunpack.c.h.b16 %v1028
        %v1585 = vunpack.c.l.b16 %v1029
        %v1586 = vunpack.c.h.b16 %v1029
        %v1587 = vunpack.c.l.b16 %v1030
        %v1588 = vunpack.c.h.b16 %v1030
        %v1589 = vunpack.c.l.b16 %v1031
        %v1590 = vunpack.c.h.b16 %v1031
        %v1591 = vunpack.c.l.b16 %v1032
        %v1592 = vunpack.c.h.b16 %v1032
        %v1593 = vunpack.c.l.b16 %v1033
        %v1594 = vunpack.c.h.b16 %v1033
        %v1595 = vunpack.c.l.b16 %v1034
        %v1596 = vunpack.c.h.b16 %v1034
        %v1597 = vunpack.c.l.b16 %v1035
        %v1598 = vunpack.c.h.b16 %v1035
        %v1599 = vunpack.c.l.b16 %v1036
        %v1600 = vunpack.c.h.b16 %v1036
        %v1601 = vunpack.c.l.b16 %v1037
        %v1602 = vunpack.c.h.b16 %v1037
        %v1603 = vunpack.c.l.b16 %v1038
        %v1604 = vunpack.c.h.b16 %v1038
        %v1605 = vunpack.c.l.b16 %v1039
        %v1606 = vunpack.c.h.b16 %v1039
        %v1607 = vunpack.c.l.b16 %v1040
        %v1608 = vunpack.c.h.b16 %v1040
        %v1609 = vunpack.c.l.b16 %v1041
        %v1610 = vunpack.c.h.b16 %v1041
        %v1611 = vunpack.c.l.b16 %v1042
        %v1612 = vunpack.c.h.b16 %v1042
        %v1613 = vunpack.c.l.b16 %v1043
        %v1614 = vunpack.c.h.b16 %v1043
        %v1615 = vunpack.c.l.b16 %v1044
        %v1616 = vunpack.c.h.b16 %v1044
        %v1617 = vunpack.c.l.b16 %v1045
        %v1618 = vunpack.c.h.b16 %v1045
        %v1619 = vunpack.c.l.b16 %v1046
        %v1620 = vunpack.c.h.b16 %v1046
        %v1621 = vunpack.c.l.b16 %v1047
        %v1622 = vunpack.c.h.b16 %v1047
        %v1623 = vunpack.c.l.b16 %v1048
        %v1624 = vunpack.c.h.b16 %v1048
        %v1625 = vunpack.c.l.b16 %v1049
        %v1626 = vunpack.c.h.b16 %v1049
        %v1627 = vunpack.c.l.b16 %v1050
        %v1628 = vunpack.c.h.b16 %v1050
        %v1629 = vunpack.c.l.b16 %v1051
        %v1630 = vunpack.c.h.b16 %v1051
        %v1631 = vunpack.c.l.b16 %v1052
        %v1632 = vunpack.c.h.b16 %v1052
        %v1633 = vunpack.c.l.b16 %v1053
        %v1634 = vunpack.c.h.b16 %v1053
        %v1635 = vunpack.c.l.b16 %v1054
        %v1636 = vunpack.c.h.b16 %v1054
        %v1637 = vunpack.c.l.b16 %v1055
        %v1638 = vunpack.c.h.b16 %v1055
        %v1639 = vunpack.c.l.b16 %v1056
        %v1640 = vunpack.c.h.b16 %v1056
        %v1641 = vunpack.c.l.b16 %v1057
        %v1642 = vunpack.c.h.b16 %v1057
        %v1643 = vunpack.c.l.b16 %v1058
        %v1644 = vunpack.c.h.b16 %v1058
        %v1645 = vunpack.c.l.b16 %v1059
        %v1646 = vunpack.c.h.b16 %v1059
        %v1647 = vunpack.c.l.b16 %v1060
        %v1648 = vunpack.c.h.b16 %v1060
        %v1649 = vunpack.c.l.b16 %v1061
        %v1650 = vunpack.c.h.b16 %v1061
        %v1651 = vunpack.c.l.b16 %v1062
        %v1652 = vunpack.c.h.b16 %v1062
        %v1653 = vunpack.c.l.b16 %v1063
        %v1654 = vunpack.c.h.b16 %v1063
        %v1655 = vunpack.c.l.b16 %v1064
        %v1656 = vunpack.c.h.b16 %v1064
        %v1657 = vunpack.c.l.b16 %v1065
        %v1658 = vunpack.c.h.b16 %v1065
        %v1659 = vunpack.c.l.b16 %v1066
        %v1660 = vunpack.c.h.b16 %v1066
        %v1661 = vunpack.c.l.b16 %v1067
        %v1662 = vunpack.c.h.b16 %v1067
        %v1663 = vunpack.c.l.b16 %v1068
        %v1664 = vunpack.c.h.b16 %v1068
        %v1665 = vunpack.c.l.b16 %v1069
        %v1666 = vunpack.c.h.b16 %v1069
        %v1667 = vunpack.c.l.b16 %v1070
        %v1668 = vunpack.c.h.b16 %v1070
        %v1669 = vunpack.c.l.b16 %v1071
        %v1670 = vunpack.c.h.b16 %v1071
        %v1671 = vunpack.c.l.b16 %v1072
        %v1672 = vunpack.c.h.b16 %v1072
        %v1673 = vunpack.c.l.b16 %v1073
        %v1674 = vunpack.c.h.b16 %v1073
        %v1675 = vunpack.c.l.b16 %v1074
        %v1676 = vunpack.c.h.b16 %v1074
        %v1677 = vunpack.c.l.b16 %v1075
        %v1678 = vunpack.c.h.b16 %v1075
        %v1679 = vunpack.c.l.b16 %v1076
        %v1680 = vunpack.c.h.b16 %v1076
        %v1681 = vunpack.c.l.b16 %v1077
        %v1682 = vunpack.c.h.b16 %v1077
        %v1683 = vunpack.c.l.b16 %v1078
        %v1684 = vunpack.c.h.b16 %v1078
        %v1685 = vunpack.c.l.b16 %v1079
        %v1686 = vunpack.c.h.b16 %v1079
        %v1687 = vunpack.c.l.b16 %v1080
        %v1688 = vunpack.c.h.b16 %v1080
        %v1689 = vunpack.c.l.b16 %v1081
        %v1690 = vunpack.c.h.b16 %v1081
        %v1691 = vunpack.c.l.b16 %v1082
        %v1692 = vunpack.c.h.b16 %v1082
        %v1693 = vunpack.c.l.b16 %v1083
        %v1694 = vunpack.c.h.b16 %v1083
        %v1695 = vunpack.c.l.b16 %v1084
        %v1696 = vunpack.c.h.b16 %v1084
        %v1697 = vunpack.c.l.b16 %v1085
        %v1698 = vunpack.c.h.b16 %v1085
        %v1699 = vunpack.c.l.b16 %v1086
        %v1700 = vunpack.c.h.b16 %v1086
        %v1701 = vunpack.c.l.b16 %v1087
        %v1702 = vunpack.c.h.b16 %v1087
        %v1703 = vunpack.c.l.b16 %v1088
        %v1704 = vunpack.c.h.b16 %v1088
        %v1705 = vunpack.c.l.b16 %v1089
        %v1706 = vunpack.c.h.b16 %v1089
        %v1707 = vunpack.c.l.b16 %v1090
        %v1708 = vunpack.c.h.b16 %v1090
        %v1709 = vunpack.c.l.b16 %v1091
        %v1710 = vunpack.c.h.b16 %v1091
        %v1711 = vunpack.c.l.b16 %v1092
        %v1712 = vunpack.c.h.b16 %v1092
        %v1713 = vunpack.c.l.b16 %v1093
        %v1714 = vunpack.c.h.b16 %v1093
        %v1715 = vunpack.c.l.b16 %v1094
        %v1716 = vunpack.c.h.b16 %v1094
        %v1717 = vunpack.c.l.b16 %v1095
        %v1718 = vunpack.c.h.b16 %v1095
        %v1719 = vunpack.c.l.b16 %v1096
        %v1720 = vunpack.c.h.b16 %v1096
        %v1721 = vunpack.c.l.b16 %v1097
        %v1722 = vunpack.c.h.b16 %v1097
        %v1723 = vunpack.c.l.b16 %v1098
        %v1724 = vunpack.c.h.b16 %v1098
        %v1725 = vunpack.c.l.b16 %v1099
        %v1726 = vunpack.c.h.b16 %v1099
        %v1727 = vunpack.c.l.b16 %v1100
        %v1728 = vunpack.c.h.b16 %v1100
        %v1729 = vunpack.c.l.b16 %v1101
        %v1730 = vunpack.c.h.b16 %v1101
        %v1731 = vunpack.c.l.b16 %v1102
        %v1732 = vunpack.c.h.b16 %v1102
        %v1733 = vunpack.c.l.b16 %v1103
        %v1734 = vunpack.c.h.b16 %v1103
        %v1735 = vunpack.c.l.b16 %v1104
        %v1736 = vunpack.c.h.b16 %v1104
        %v1737 = vunpack.c.l.b16 %v1105
        %v1738 = vunpack.c.h.b16 %v1105
        %v1739 = vunpack.c.l.b16 %v1106
        %v1740 = vunpack.c.h.b16 %v1106
        %v1741 = vunpack.c.l.b16 %v1107
        %v1742 = vunpack.c.h.b16 %v1107
        %v1743 = vunpack.c.l.b16 %v1108
        %v1744 = vunpack.c.h.b16 %v1108
        %v1745 = vunpack.c.l.b16 %v1109
        %v1746 = vunpack.c.h.b16 %v1109
        %v1747 = vunpack.c.l.b16 %v1110
        %v1748 = vunpack.c.h.b16 %v1110
        %v1749 = vunpack.c.l.b16 %v1111
        %v1750 = vunpack.c.h.b16 %v1111
        %v1751 = vunpack.c.l.b16 %v1112
        %v1752 = vunpack.c.h.b16 %v1112
        %v1753 = vunpack.c.l.b16 %v1113
        %v1754 = vunpack.c.h.b16 %v1113
        %v1755 = vunpack.c.l.b16 %v1114
        %v1756 = vunpack.c.h.b16 %v1114
        %v1757 = vunpack.c.l.b16 %v1115
        %v1758 = vunpack.c.h.b16 %v1115
        %v1759 = vunpack.c.l.b16 %v1116
        %v1760 = vunpack.c.h.b16 %v1116
        %v1761 = vunpack.c.l.b16 %v1117
        %v1762 = vunpack.c.h.b16 %v1117
        %v1763 = vunpack.c.l.b16 %v1118
        %v1764 = vunpack.c.h.b16 %v1118
        %v1765 = vunpack.c.l.b16 %v1119
        %v1766 = vunpack.c.h.b16 %v1119
        %v1767 = vunpack.c.l.b16 %v1120
        %v1768 = vunpack.c.h.b16 %v1120
        %v1769 = vunpack.c.l.b16 %v1121
        %v1770 = vunpack.c.h.b16 %v1121
        %v1771 = vunpack.c.l.b16 %v1122
        %v1772 = vunpack.c.h.b16 %v1122
        %v1773 = vunpack.c.l.b16 %v1123
        %v1774 = vunpack.c.h.b16 %v1123
        %v1775 = vunpack.c.l.b16 %v1124
        %v1776 = vunpack.c.h.b16 %v1124
        %v1777 = vunpack.c.l.b16 %v1125
        %v1778 = vunpack.c.h.b16 %v1125
        %v1779 = vunpack.c.l.b16 %v1126
        %v1780 = vunpack.c.h.b16 %v1126
        %v1781 = vunpack.c.l.b16 %v1127
        %v1782 = vunpack.c.h.b16 %v1127
        %v1783 = vunpack.c.l.b16 %v1128
        %v1784 = vunpack.c.h.b16 %v1128
        %v1785 = vunpack.c.l.b16 %v1129
        %v1786 = vunpack.c.h.b16 %v1129
        %v1787 = vunpack.c.l.b16 %v1130
        %v1788 = vunpack.c.h.b16 %v1130
        %v1789 = vunpack.c.l.b16 %v1131
        %v1790 = vunpack.c.h.b16 %v1131
        %v1791 = vunpack.c.l.b16 %v1132
        %v1792 = vunpack.c.h.b16 %v1132
        %v1793 = vunpack.c.l.b16 %v1133
        %v1794 = vunpack.c.h.b16 %v1133
        %v1795 = vunpack.c.l.b16 %v1134
        %v1796 = vunpack.c.h.b16 %v1134
        %v1797 = vunpack.c.l.b16 %v1135
        %v1798 = vunpack.c.h.b16 %v1135
        %v1799 = vunpack.c.l.b16 %v1136
        %v1800 = vunpack.c.h.b16 %v1136
        %v1801 = vunpack.c.l.b16 %v1137
        %v1802 = vunpack.c.h.b16 %v1137
        %v1803 = vunpack.c.l.b16 %v1138
        %v1804 = vunpack.c.h.b16 %v1138
        %v1805 = vunpack.c.l.b16 %v1139
        %v1806 = vunpack.c.h.b16 %v1139
        %v1807 = vunpack.c.l.b16 %v1140
        %v1808 = vunpack.c.h.b16 %v1140
        %v1809 = vunpack.c.l.b16 %v1141
        %v1810 = vunpack.c.h.b16 %v1141
        %v1811 = vunpack.c.l.b16 %v1142
        %v1812 = vunpack.c.h.b16 %v1142
        %v1813 = vunpack.c.l.b16 %v1143
        %v1814 = vunpack.c.h.b16 %v1143
        %v1815 = vunpack.c.l.b16 %v1144
        %v1816 = vunpack.c.h.b16 %v1144
        %v1817 = vunpack.c.l.b16 %v1145
        %v1818 = vunpack.c.h.b16 %v1145
        %v1819 = vunpack.c.l.b16 %v1146
        %v1820 = vunpack.c.h.b16 %v1146
        %v1821 = vunpack.c.l.b16 %v1147
        %v1822 = vunpack.c.h.b16 %v1147
        %v1823 = vunpack.c.l.b16 %v1148
        %v1824 = vunpack.c.h.b16 %v1148
        %v1825 = vunpack.c.l.b16 %v1149
        %v1826 = vunpack.c.h.b16 %v1149
        %v1827 = vunpack.c.l.b16 %v1150
        %v1828 = vunpack.c.h.b16 %v1150
        %v1829 = vunpack.c.l.b16 %v1151
        %v1830 = vunpack.c.h.b16 %v1151
        %v1831 = vunpack.c.l.b16 %v1152
        %v1832 = vunpack.c.h.b16 %v1152
        %v1833 = vunpack.c.l.b16 %v1153
        %v1834 = vunpack.c.h.b16 %v1153
        %v1835 = vunpack.c.l.b16 %v1154
        %v1836 = vunpack.c.h.b16 %v1154
        %v1837 = vunpack.c.l.b16 %v1155
        %v1838 = vunpack.c.h.b16 %v1155
        %v1839 = vunpack.c.l.b16 %v1156
        %v1840 = vunpack.c.h.b16 %v1156
        %v1841 = vunpack.c.l.b16 %v1157
        %v1842 = vunpack.c.h.b16 %v1157
        %v1843 = vunpack.c.l.b16 %v1158
        %v1844 = vunpack.c.h.b16 %v1158
        %v1845 = vunpack.c.l.b16 %v1159
        %v1846 = vunpack.c.h.b16 %v1159
        %v1847 = vunpack.c.l.b16 %v1160
        %v1848 = vunpack.c.h.b16 %v1160
        %v1849 = vunpack.c.l.b16 %v1161
        %v1850 = vunpack.c.h.b16 %v1161
        %v1851 = vunpack.c.l.b16 %v1162
        %v1852 = vunpack.c.h.b16 %v1162
        %v1853 = vunpack.c.l.b16 %v1163
        %v1854 = vunpack.c.h.b16 %v1163
        %v1855 = vunpack.c.l.b16 %v1164
        %v1856 = vunpack.c.h.b16 %v1164
        %v1857 = vunpack.c.l.b16 %v1165
        %v1858 = vunpack.c.h.b16 %v1165
        %v1859 = vunpack.c.l.b16 %v1166
        %v1860 = vunpack.c.h.b16 %v1166
        %v1861 = vunpack.c.l.b16 %v1167
        %v1862 = vunpack.c.h.b16 %v1167
        %v1863 = vunpack.c.l.b16 %v1168
        %v1864 = vunpack.c.h.b16 %v1168
        %v1865 = vunpack.c.l.b16 %v1169
        %v1866 = vunpack.c.h.b16 %v1169
        %v1867 = vunpack.c.l.b16 %v1170
        %v1868 = vunpack.c.h.b16 %v1170
        %v1869 = vunpack.c.l.b16 %v1171
        %v1870 = vunpack.c.h.b16 %v1171
        %v1871 = vunpack.c.l.b16 %v1172
        %v1872 = vunpack.c.h.b16 %v1172
        %v1873 = vunpack.c.l.b16 %v1173
        %v1874 = vunpack.c.h.b16 %v1173
        %v1875 = vunpack.c.l.b16 %v1174
        %v1876 = vunpack.c.h.b16 %v1174
        %v1877 = vunpack.c.l.b16 %v1175
        %v1878 = vunpack.c.h.b16 %v1175
        %v1879 = vunpack.c.l.b16 %v1176
        %v1880 = vunpack.c.h.b16 %v1176
        %v1881 = vunpack.c.l.b16 %v1177
        %v1882 = vunpack.c.h.b16 %v1177
        %v1883 = vunpack.c.l.b16 %v1178
        %v1884 = vunpack.c.h.b16 %v1178
        %v1885 = vunpack.c.l.b16 %v1179
        %v1886 = vunpack.c.h.b16 %v1179
        %v1887 = vunpack.c.l.b16 %v1180
        %v1888 = vunpack.c.h.b16 %v1180
        %v1889 = vunpack.c.l.b16 %v1181
        %v1890 = vunpack.c.h.b16 %v1181
        %v1891 = vunpack.c.l.b16 %v1182
        %v1892 = vunpack.c.h.b16 %v1182
        %v1893 = vunpack.c.l.b16 %v1183
        %v1894 = vunpack.c.h.b16 %v1183
        %v1895 = vunpack.c.l.b16 %v1184
        %v1896 = vunpack.c.h.b16 %v1184
        %v1897 = vunpack.c.l.b16 %v1185
        %v1898 = vunpack.c.h.b16 %v1185
        %v1899 = vunpack.c.l.b16 %v1186
        %v1900 = vunpack.c.h.b16 %v1186
        %v1901 = vunpack.c.l.b16 %v1187
        %v1902 = vunpack.c.h.b16 %v1187
        %v1903 = vunpack.c.l.b16 %v1188
        %v1904 = vunpack.c.h.b16 %v1188
        %v1905 = vunpack.c.l.b16 %v1189
        %v1906 = vunpack.c.h.b16 %v1189
        %v1907 = vunpack.c.l.b16 %v1190
        %v1908 = vunpack.c.h.b16 %v1190
        %v1909 = vunpack.c.l.b16 %v1191
        %v1910 = vunpack.c.h.b16 %v1191
        %v1911 = vunpack.c.l.b16 %v1192
        %v1912 = vunpack.c.h.b16 %v1192
        %v1913 = vunpack.c.l.b16 %v1193
        %v1914 = vunpack.c.h.b16 %v1193
        %v1915 = vunpack.c.l.b16 %v1194
        %v1916 = vunpack.c.h.b16 %v1194
        %v1917 = vunpack.c.l.b16 %v1195
        %v1918 = vunpack.c.h.b16 %v1195
        %v1919 = vunpack.c.l.b16 %v1196
        %v1920 = vunpack.c.h.b16 %v1196
        %v1921 = vunpack.c.l.b16 %v1197
        %v1922 = vunpack.c.h.b16 %v1197
        %v1923 = vunpack.c.l.b16 %v1198
        %v1924 = vunpack.c.h.b16 %v1198
        %v1925 = vunpack.c.l.b16 %v1199
        %v1926 = vunpack.c.h.b16 %v1199
        %v1927 = vunpack.c.l.b16 %v1200
        %v1928 = vunpack.c.h.b16 %v1200
        %v1929 = vunpack.c.l.b16 %v1201
        %v1930 = vunpack.c.h.b16 %v1201
        %v1931 = vunpack.c.l.b16 %v1202
        %v1932 = vunpack.c.h.b16 %v1202
        %v1933 = vunpack.c.l.b16 %v1203
        %v1934 = vunpack.c.h.b16 %v1203
        %v1935 = vunpack.c.l.b16 %v1204
        %v1936 = vunpack.c.h.b16 %v1204
        %v1937 = vunpack.c.l.b16 %v1205
        %v1938 = vunpack.c.h.b16 %v1205
        %v1939 = vunpack.c.l.b16 %v1206
        %v1940 = vunpack.c.h.b16 %v1206
        %v1941 = vunpack.c.l.b16 %v1207
        %v1942 = vunpack.c.h.b16 %v1207
        %v1943 = vunpack.c.l.b16 %v1208
        %v1944 = vunpack.c.h.b16 %v1208
        %v1945 = vunpack.c.l.b16 %v1209
        %v1946 = vunpack.c.h.b16 %v1209
        %v1947 = vunpack.c.l.b16 %v1210
        %v1948 = vunpack.c.h.b16 %v1210
        %v1949 = vunpack.c.l.b16 %v1211
        %v1950 = vunpack.c.h.b16 %v1211
        %v1951 = vunpack.c.l.b16 %v1212
        %v1952 = vunpack.c.h.b16 %v1212
        %v1953 = vunpack.c.l.b16 %v1213
        %v1954 = vunpack.c.h.b16 %v1213
        %v1955 = vunpack.c.l.b16 %v1214
        %v1956 = vunpack.c.h.b16 %v1214
        %v1957 = vunpack.c.l.b16 %v1215
        %v1958 = vunpack.c.h.b16 %v1215
        %v1959 = vunpack.c.l.b16 %v1216
        %v1960 = vunpack.c.h.b16 %v1216
        %v1961 = vunpack.c.l.b16 %v1217
        %v1962 = vunpack.c.h.b16 %v1217
        %v1963 = vunpack.c.l.b16 %v1218
        %v1964 = vunpack.c.h.b16 %v1218
        %v1965 = vunpack.c.l.b16 %v1219
        %v1966 = vunpack.c.h.b16 %v1219
        %v1967 = vunpack.c.l.b16 %v1220
        %v1968 = vunpack.c.h.b16 %v1220
        %v1969 = vunpack.c.l.b16 %v1221
        %v1970 = vunpack.c.h.b16 %v1221
        %v1971 = vunpack.c.l.b16 %v1222
        %v1972 = vunpack.c.h.b16 %v1222
        %v1973 = vunpack.c.l.b16 %v1223
        %v1974 = vunpack.c.h.b16 %v1223
        %v1975 = vunpack.c.l.b16 %v1224
        %v1976 = vunpack.c.h.b16 %v1224
        %v1977 = vunpack.c.l.b16 %v1225
        %v1978 = vunpack.c.h.b16 %v1225
        %v1979 = vunpack.c.l.b16 %v1226
        %v1980 = vunpack.c.h.b16 %v1226
        %v1981 = vunpack.c.l.b16 %v1227
        %v1982 = vunpack.c.h.b16 %v1227
        %v1983 = vunpack.c.l.b16 %v1228
        %v1984 = vunpack.c.h.b16 %v1228
        %v1985 = vunpack.c.l.b16 %v1229
        %v1986 = vunpack.c.h.b16 %v1229
        %v1987 = vunpack.c.l.b16 %v1230
        %v1988 = vunpack.c.h.b16 %v1230
        %v1989 = vunpack.c.l.b16 %v1231
        %v1990 = vunpack.c.h.b16 %v1231
        %v1991 = vunpack.c.l.b16 %v1232
        %v1992 = vunpack.c.h.b16 %v1232
        %v1993 = vunpack.c.l.b16 %v1233
        %v1994 = vunpack.c.h.b16 %v1233
        %v1995 = vunpack.c.l.b16 %v1234
        %v1996 = vunpack.c.h.b16 %v1234
        %v1997 = vunpack.c.l.b16 %v1235
        %v1998 = vunpack.c.h.b16 %v1235
        %v1999 = vunpack.c.l.b16 %v1236
        %v2000 = vunpack.c.h.b16 %v1236
        %v2001 = vunpack.c.l.b16 %v1237
        %v2002 = vunpack.c.h.b16 %v1237
        %v2003 = vunpack.c.l.b16 %v1238
        %v2004 = vunpack.c.h.b16 %v1238
        %v2005 = vunpack.c.l.b16 %v1239
        %v2006 = vunpack.c.h.b16 %v1239
        %v2007 = vunpack.c.l.b16 %v1240
        %v2008 = vunpack.c.h.b16 %v1240
        %v2009 = vunpack.c.l.b16 %v1241
        %v2010 = vunpack.c.h.b16 %v1241
        %v2011 = vunpack.c.l.b16 %v1242
        %v2012 = vunpack.c.h.b16 %v1242
        %v2013 = vunpack.c.l.b16 %v1243
        %v2014 = vunpack.c.h.b16 %v1243
        %v2015 = vunpack.c.l.b16 %v1244
        %v2016 = vunpack.c.h.b16 %v1244
        %v2017 = vunpack.c.l.b16 %v1245
        %v2018 = vunpack.c.h.b16 %v1245
        %v2019 = vunpack.c.l.b16 %v1246
        %v2020 = vunpack.c.h.b16 %v1246
        %v2021 = vunpack.c.l.b16 %v1247
        %v2022 = vunpack.c.h.b16 %v1247
        %v2023 = vunpack.c.l.b16 %v1248
        %v2024 = vunpack.c.h.b16 %v1248
        %v2025 = vunpack.c.l.b16 %v1249
        %v2026 = vunpack.c.h.b16 %v1249
        %v2027 = vunpack.c.l.b16 %v1250
        %v2028 = vunpack.c.h.b16 %v1250
        %v2029 = vunpack.c.l.b16 %v1251
        %v2030 = vunpack.c.h.b16 %v1251
        %v2031 = vunpack.c.l.b16 %v1252
        %v2032 = vunpack.c.h.b16 %v1252
        %v2033 = vunpack.c.l.b16 %v1253
        %v2034 = vunpack.c.h.b16 %v1253
        %v2035 = vunpack.c.l.b16 %v1254
        %v2036 = vunpack.c.h.b16 %v1254
        %v2037 = vunpack.c.l.b16 %v1255
        %v2038 = vunpack.c.h.b16 %v1255
        %v2039 = vunpack.c.l.b16 %v1256
        %v2040 = vunpack.c.h.b16 %v1256
        %v2041 = vunpack.c.l.b16 %v1257
        %v2042 = vunpack.c.h.b16 %v1257
        %v2043 = vunpack.c.l.b16 %v1258
        %v2044 = vunpack.c.h.b16 %v1258
        %v2045 = vunpack.c.l.b16 %v1259
        %v2046 = vunpack.c.h.b16 %v1259
        %v2047 = vunpack.c.l.b16 %v1260
        %v2048 = vunpack.c.h.b16 %v1260
        %v2049 = vunpack.c.l.b16 %v1261
        %v2050 = vunpack.c.h.b16 %v1261
        %v2051 = vunpack.c.l.b16 %v1262
        %v2052 = vunpack.c.h.b16 %v1262
        %v2053 = vpack.c.b16 %v1545, %v1541
        %v2054 = vpack.c.b16 %v1546, %v1542
        %v2055 = vpack.c.b16 %v1547, %v1543
        %v2056 = vpack.c.b16 %v1548, %v1544
        %v2057 = vpack.c.b16 %v1553, %v1549
        %v2058 = vpack.c.b16 %v1554, %v1550
        %v2059 = vpack.c.b16 %v1555, %v1551
        %v2060 = vpack.c.b16 %v1556, %v1552
        %v2061 = vpack.c.b16 %v1561, %v1557
        %v2062 = vpack.c.b16 %v1562, %v1558
        %v2063 = vpack.c.b16 %v1563, %v1559
        %v2064 = vpack.c.b16 %v1564, %v1560
        %v2065 = vpack.c.b16 %v1569, %v1565
        %v2066 = vpack.c.b16 %v1570, %v1566
        %v2067 = vpack.c.b16 %v1571, %v1567
        %v2068 = vpack.c.b16 %v1572, %v1568
        %v2069 = vpack.c.b16 %v1577, %v1573
        %v2070 = vpack.c.b16 %v1578, %v1574
        %v2071 = vpack.c.b16 %v1579, %v1575
        %v2072 = vpack.c.b16 %v1580, %v1576
        %v2073 = vpack.c.b16 %v1585, %v1581
        %v2074 = vpack.c.b16 %v1586, %v1582
        %v2075 = vpack.c.b16 %v1587, %v1583
        %v2076 = vpack.c.b16 %v1588, %v1584
        %v2077 = vpack.c.b16 %v1593, %v1589
        %v2078 = vpack.c.b16 %v1594, %v1590
        %v2079 = vpack.c.b16 %v1595, %v1591
        %v2080 = vpack.c.b16 %v1596, %v1592
        %v2081 = vpack.c.b16 %v1601, %v1597
        %v2082 = vpack.c.b16 %v1602, %v1598
        %v2083 = vpack.c.b16 %v1603, %v1599
        %v2084 = vpack.c.b16 %v1604, %v1600
        %v2085 = vpack.c.b16 %v1609, %v1605
        %v2086 = vpack.c.b16 %v1610, %v1606
        %v2087 = vpack.c.b16 %v1611, %v1607
        %v2088 = vpack.c.b16 %v1612, %v1608
        %v2089 = vpack.c.b16 %v1617, %v1613
        %v2090 = vpack.c.b16 %v1618, %v1614
        %v2091 = vpack.c.b16 %v1619, %v1615
        %v2092 = vpack.c.b16 %v1620, %v1616
        %v2093 = vpack.c.b16 %v1625, %v1621
        %v2094 = vpack.c.b16 %v1626, %v1622
        %v2095 = vpack.c.b16 %v1627, %v1623
        %v2096 = vpack.c.b16 %v1628, %v1624
        %v2097 = vpack.c.b16 %v1633, %v1629
        %v2098 = vpack.c.b16 %v1634, %v1630
        %v2099 = vpack.c.b16 %v1635, %v1631
        %v2100 = vpack.c.b16 %v1636, %v1632
        %v2101 = vpack.c.b16 %v1641, %v1637
        %v2102 = vpack.c.b16 %v1642, %v1638
        %v2103 = vpack.c.b16 %v1643, %v1639
        %v2104 = vpack.c.b16 %v1644, %v1640
        %v2105 = vpack.c.b16 %v1649, %v1645
        %v2106 = vpack.c.b16 %v1650, %v1646
        %v2107 = vpack.c.b16 %v1651, %v1647
        %v2108 = vpack.c.b16 %v1652, %v1648
        %v2109 = vpack.c.b16 %v1657, %v1653
        %v2110 = vpack.c.b16 %v1658, %v1654
        %v2111 = vpack.c.b16 %v1659, %v1655
        %v2112 = vpack.c.b16 %v1660, %v1656
        %v2113 = vpack.c.b16 %v1665, %v1661
        %v2114 = vpack.c.b16 %v1666, %v1662
        %v2115 = vpack.c.b16 %v1667, %v1663
        %v2116 = vpack.c.b16 %v1668, %v1664
        %v2117 = vpack.c.b16 %v1673, %v1669
        %v2118 = vpack.c.b16 %v1674, %v1670
        %v2119 = vpack.c.b16 %v1675, %v1671
        %v2120 = vpack.c.b16 %v1676, %v1672
        %v2121 = vpack.c.b16 %v1681, %v1677
        %v2122 = vpack.c.b16 %v1682, %v1678
        %v2123 = vpack.c.b16 %v1683, %v1679
        %v2124 = vpack.c.b16 %v1684, %v1680
        %v2125 = vpack.c.b16 %v1689, %v1685
        %v2126 = vpack.c.b16 %v1690, %v1686
        %v2127 = vpack.c.b16 %v1691, %v1687
        %v2128 = vpack.c.b16 %v1692, %v1688
        %v2129 = vpack.c.b16 %v1697, %v1693
        %v2130 = vpack.c.b16 %v1698, %v1694
        %v2131 = vpack.c.b16 %v1699, %v1695
        %v2132 = vpack.c.b16 %v1700, %v1696
        %v2133 = vpack.c.b16 %v1705, %v1701
        %v2134 = vpack.c.b16 %v1706, %v1702
        %v2135 = vpack.c.b16 %v1707, %v1703
        %v2136 = vpack.c.b16 %v1708, %v1704
        %v2137 = vpack.c.b16 %v1713, %v1709
        %v2138 = vpack.c.b16 %v1714, %v1710
        %v2139 = vpack.c.b16 %v1715, %v1711
        %v2140 = vpack.c.b16 %v1716, %v1712
        %v2141 = vpack.c.b16 %v1721, %v1717
        %v2142 = vpack.c.b16 %v1722, %v1718
        %v2143 = vpack.c.b16 %v1723, %v1719
        %v2144 = vpack.c.b16 %v1724, %v1720
        %v2145 = vpack.c.b16 %v1729, %v1725
        %v2146 = vpack.c.b16 %v1730, %v1726
        %v2147 = vpack.c.b16 %v1731, %v1727
        %v2148 = vpack.c.b16 %v1732, %v1728
        %v2149 = vpack.c.b16 %v1737, %v1733
        %v2150 = vpack.c.b16 %v1738, %v1734
        %v2151 = vpack.c.b16 %v1739, %v1735
        %v2152 = vpack.c.b16 %v1740, %v1736
        %v2153 = vpack.c.b16 %v1745, %v1741
        %v2154 = vpack.c.b16 %v1746, %v1742
        %v2155 = vpack.c.b16 %v1747, %v1743
        %v2156 = vpack.c.b16 %v1748, %v1744
        %v2157 = vpack.c.b16 %v1753, %v1749
        %v2158 = vpack.c.b16 %v1754, %v1750
        %v2159 = vpack.c.b16 %v1755, %v1751
        %v2160 = vpack.c.b16 %v1756, %v1752
        %v2161 = vpack.c.b16 %v1761, %v1757
        %v2162 = vpack.c.b16 %v1762, %v1758
        %v2163 = vpack.c.b16 %v1763, %v1759
        %v2164 = vpack.c.b16 %v1764, %v1760
        %v2165 = vpack.c.b16 %v1769, %v1765
        %v2166 = vpack.c.b16 %v1770, %v1766
        %v2167 = vpack.c.b16 %v1771, %v1767
        %v2168 = vpack.c.b16 %v1772, %v1768
        %v2169 = vpack.c.b16 %v1777, %v1773
        %v2170 = vpack.c.b16 %v1778, %v1774
        %v2171 = vpack.c.b16 %v1779, %v1775
        %v2172 = vpack.c.b16 %v1780, %v1776
        %v2173 = vpack.c.b16 %v1785, %v1781
        %v2174 = vpack.c.b16 %v1786, %v1782
        %v2175 = vpack.c.b16 %v1787, %v1783
        %v2176 = vpack.c.b16 %v1788, %v1784
        %v2177 = vpack.c.b16 %v1793, %v1789
        %v2178 = vpack.c.b16 %v1794, %v1790
        %v2179 = vpack.c.b16 %v1795, %v1791
        %v2180 = vpack.c.b16 %v1796, %v1792
        %v2181 = vpack.c.b16 %v1801, %v1797
        %v2182 = vpack.c.b16 %v1802, %v1798
        %v2183 = vpack.c.b16 %v1803, %v1799
        %v2184 = vpack.c.b16 %v1804, %v1800
        %v2185 = vpack.c.b16 %v1809, %v1805
        %v2186 = vpack.c.b16 %v1810, %v1806
        %v2187 = vpack.c.b16 %v1811, %v1807
        %v2188 = vpack.c.b16 %v1812, %v1808
        %v2189 = vpack.c.b16 %v1817, %v1813
        %v2190 = vpack.c.b16 %v1818, %v1814
        %v2191 = vpack.c.b16 %v1819, %v1815
        %v2192 = vpack.c.b16 %v1820, %v1816
        %v2193 = vpack.c.b16 %v1825, %v1821
        %v2194 = vpack.c.b16 %v1826, %v1822
        %v2195 = vpack.c.b16 %v1827, %v1823
        %v2196 = vpack.c.b16 %v1828, %v1824
        %v2197 = vpack.c.b16 %v1833, %v1829
        %v2198 = vpack.c.b16 %v1834, %v1830
        %v2199 = vpack.c.b16 %v1835, %v1831
        %v2200 = vpack.c.b16 %v1836, %v1832
        %v2201 = vpack.c.b16 %v1841, %v1837
        %v2202 = vpack.c.b16 %v1842, %v1838
        %v2203 = vpack.c.b16 %v1843, %v1839
        %v2204 = vpack.c.b16 %v1844, %v1840
        %v2205 = vpack.c.b16 %v1849, %v1845
        %v2206 = vpack.c.b16 %v1850, %v1846
        %v2207 = vpack.c.b16 %v1851, %v1847
        %v2208 = vpack.c.b16 %v1852, %v1848
        %v2209 = vpack.c.b16 %v1857, %v1853
        %v2210 = vpack.c.b16 %v1858, %v1854
        %v2211 = vpack.c.b16 %v1859, %v1855
        %v2212 = vpack.c.b16 %v1860, %v1856
        %v2213 = vpack.c.b16 %v1865, %v1861
        %v2214 = vpack.c.b16 %v1866, %v1862
        %v2215 = vpack.c.b16 %v1867, %v1863
        %v2216 = vpack.c.b16 %v1868, %v1864
        %v2217 = vpack.c.b16 %v1873, %v1869
        %v2218 = vpack.c.b16 %v1874, %v1870
        %v2219 = vpack.c.b16 %v1875, %v1871
        %v2220 = vpack.c.b16 %v1876, %v1872
        %v2221 = vpack.c.b16 %v1881, %v1877
        %v2222 = vpack.c.b16 %v1882, %v1878
        %v2223 = vpack.c.b16 %v1883, %v1879
        %v2224 = vpack.c.b16 %v1884, %v1880
        %v2225 = vpack.c.b16 %v1889, %v1885
        %v2226 = vpack.c.b16 %v1890, %v1886
        %v2227 = vpack.c.b16 %v1891, %v1887
        %v2228 = vpack.c.b16 %v1892, %v1888
        %v2229 = vpack.c.b16 %v1897, %v1893
        %v2230 = vpack.c.b16 %v1898, %v1894
        %v2231 = vpack.c.b16 %v1899, %v1895
        %v2232 = vpack.c.b16 %v1900, %v1896
        %v2233 = vpack.c.b16 %v1905, %v1901
        %v2234 = vpack.c.b16 %v1906, %v1902
        %v2235 = vpack.c.b16 %v1907, %v1903
        %v2236 = vpack.c.b16 %v1908, %v1904
        %v2237 = vpack.c.b16 %v1913, %v1909
        %v2238 = vpack.c.b16 %v1914, %v1910
        %v2239 = vpack.c.b16 %v1915, %v1911
        %v2240 = vpack.c.b16 %v1916, %v1912
        %v2241 = vpack.c.b16 %v1921, %v1917
        %v2242 = vpack.c.b16 %v1922, %v1918
        %v2243 = vpack.c.b16 %v1923, %v1919
        %v2244 = vpack.c.b16 %v1924, %v1920
        %v2245 = vpack.c.b16 %v1929, %v1925
        %v2246 = vpack.c.b16 %v1930, %v1926
        %v2247 = vpack.c.b16 %v1931, %v1927
        %v2248 = vpack.c.b16 %v1932, %v1928
        %v2249 = vpack.c.b16 %v1937, %v1933
        %v2250 = vpack.c.b16 %v1938, %v1934
        %v2251 = vpack.c.b16 %v1939, %v1935
        %v2252 = vpack.c.b16 %v1940, %v1936
        %v2253 = vpack.c.b16 %v1945, %v1941
        %v2254 = vpack.c.b16 %v1946, %v1942
        %v2255 = vpack.c.b16 %v1947, %v1943
        %v2256 = vpack.c.b16 %v1948, %v1944
        %v2257 = vpack.c.b16 %v1953, %v1949
        %v2258 = vpack.c.b16 %v1954, %v1950
        %v2259 = vpack.c.b16 %v1955, %v1951
        %v2260 = vpack.c.b16 %v1956, %v1952
        %v2261 = vpack.c.b16 %v1961, %v1957
        %v2262 = vpack.c.b16 %v1962, %v1958
        %v2263 = vpack.c.b16 %v1963, %v1959
        %v2264 = vpack.c.b16 %v1964, %v1960
        %v2265 = vpack.c.b16 %v1969, %v1965
        %v2266 = vpack.c.b16 %v1970, %v1966
        %v2267 = vpack.c.b16 %v1971, %v1967
        %v2268 = vpack.c.b16 %v1972, %v1968
        %v2269 = vpack.c.b16 %v1977, %v1973
        %v2270 = vpack.c.b16 %v1978, %v1974
        %v2271 = vpack.c.b16 %v1979, %v1975
        %v2272 = vpack.c.b16 %v1980, %v1976
        %v2273 = vpack.c.b16 %v1985, %v1981
        %v2274 = vpack.c.b16 %v1986, %v1982
        %v2275 = vpack.c.b16 %v1987, %v1983
        %v2276 = vpack.c.b16 %v1988, %v1984
        %v2277 = vpack.c.b16 %v1993, %v1989
        %v2278 = vpack.c.b16 %v1994, %v1990
        %v2279 = vpack.c.b16 %v1995, %v1991
        %v2280 = vpack.c.b16 %v1996, %v1992
        %v2281 = vpack.c.b16 %v2001, %v1997
        %v2282 = vpack.c.b16 %v2002, %v1998
        %v2283 = vpack.c.b16 %v2003, %v1999
        %v2284 = vpack.c.b16 %v2004, %v2000
        %v2285 = vpack.c.b16 %v2009, %v2005
        %v2286 = vpack.c.b16 %v2010, %v2006
        %v2287 = vpack.c.b16 %v2011, %v2007
        %v2288 = vpack.c.b16 %v2012, %v2008
        %v2289 = vpack.c.b16 %v2017, %v2013
        %v2290 = vpack.c.b16 %v2018, %v2014
        %v2291 = vpack.c.b16 %v2019, %v2015
        %v2292 = vpack.c.b16 %v2020, %v2016
        %v2293 = vpack.c.b16 %v2025, %v2021
        %v2294 = vpack.c.b16 %v2026, %v2022
        %v2295 = vpack.c.b16 %v2027, %v2023
        %v2296 = vpack.c.b16 %v2028, %v2024
        %v2297 = vpack.c.b16 %v2033, %v2029
        %v2298 = vpack.c.b16 %v2034, %v2030
        %v2299 = vpack.c.b16 %v2035, %v2031
        %v2300 = vpack.c.b16 %v2036, %v2032
        %v2301 = vpack.c.b16 %v2041, %v2037
        %v2302 = vpack.c.b16 %v2042, %v2038
        %v2303 = vpack.c.b16 %v2043, %v2039
        %v2304 = vpack.c.b16 %v2044, %v2040
        %v2305 = vpack.c.b16 %v2049, %v2045
        %v2306 = vpack.c.b16 %v2050, %v2046
        %v2307 = vpack.c.b16 %v2051, %v2047
        %v2308 = vpack.c.b16 %v2052, %v2048
        %2565 = vmatprep.subr.bf16.mxu0 %v2082
        %2566 = vmatpush1.bf16.msra.mxu0 %v2081
        %2567 = vmatprep.subr.bf16.mxu0 %v2078
        %2568 = vmatpush1.bf16.msra.mxu0 %v2077
        %2569 = vmatprep.subr.bf16.mxu0 %v2074
        %2570 = vmatpush1.bf16.msra.mxu0 %v2073
        %2571 = vmatprep.subr.bf16.mxu0 %v2070
        %2572 = vmatpush1.bf16.msra.mxu0 %v2069
        %2573 = vmatprep.subr.bf16.mxu0 %v2066
        %2574 = vmatpush1.bf16.msra.mxu0 %v2065
        %2575 = vmatprep.subr.bf16.mxu0 %v2062
        %2576 = vmatpush1.bf16.msra.mxu0 %v2061
        %2577 = vmatprep.subr.bf16.mxu0 %v2058
        %2578 = vmatpush1.bf16.msra.mxu0 %v2057
        %2579 = vmatprep.subr.bf16.mxu0 %v2054
        %2580 = vmatpush1.bf16.msra.mxu0 %v2053
        %2581 = vmatprep.subr.bf16.mxu0 %v2114
        %2582 = vmatpush2.bf16.msra.mxu0 %v2113
        %2583 = vmatprep.subr.bf16.mxu0 %v2110
        %2584 = vmatpush2.bf16.msra.mxu0 %v2109
        %2585 = vmatprep.subr.bf16.mxu0 %v2106
        %2586 = vmatpush2.bf16.msra.mxu0 %v2105
        %2587 = vmatprep.subr.bf16.mxu0 %v2102
        %2588 = vmatpush2.bf16.msra.mxu0 %v2101
        %2589 = vmatprep.subr.bf16.mxu0 %v2098
        %2590 = vmatpush2.bf16.msra.mxu0 %v2097
        %2591 = vmatprep.subr.bf16.mxu0 %v2094
        %2592 = vmatpush2.bf16.msra.mxu0 %v2093
        %2593 = vmatprep.subr.bf16.mxu0 %v2090
        %2594 = vmatpush2.bf16.msra.mxu0 %v2089
        %2595 = vmatprep.subr.bf16.mxu0 %v2086
        %2596 = vmatpush2.bf16.msra.mxu0 %v2085
        %2597 = vmatprep.mubr.bf16.mxu0 %v992
        %2598 = vmatmul.mubr.bf16.gmra.mxu0 %v991
        %v2599 = vpop.f32.mrf.mxu0
        %v2600 = vadd.f32 %v1268, %v2599
        %v2601 = vpop.f32.mrf.mxu0
        %v2602 = vadd.f32 %v1272, %v2601
        %v2603 = vpop.f32.mrf.mxu0
        %v2604 = vadd.f32 %v1268, %v2603
        %v2605 = vpop.f32.mrf.mxu0
        %v2606 = vadd.f32 %v1272, %v2605
        %2607 = vmatprep.mubr.bf16.mxu0 %v1000
        %2608 = vmatmul.mubr.bf16.gmra.mxu0 %v999
        %v2609 = vpop.f32.mrf.mxu0
        %v2610 = vadd.f32 %v1268, %v2609
        %v2611 = vpop.f32.mrf.mxu0
        %v2612 = vadd.f32 %v1272, %v2611
        %v2613 = vpop.f32.mrf.mxu0
        %v2614 = vadd.f32 %v1268, %v2613
        %v2615 = vpop.f32.mrf.mxu0
        %v2616 = vadd.f32 %v1272, %v2615
        %2617 = vdwg.mxu0
        %2618 = vmatprep.subr.bf16.mxu0 %v2146
        %2619 = vmatpush1.bf16.msra.mxu0 %v2145
        %2620 = vmatprep.subr.bf16.mxu0 %v2142
        %2621 = vmatpush1.bf16.msra.mxu0 %v2141
        %2622 = vmatprep.subr.bf16.mxu0 %v2138
        %2623 = vmatpush1.bf16.msra.mxu0 %v2137
        %2624 = vmatprep.subr.bf16.mxu0 %v2134
        %2625 = vmatpush1.bf16.msra.mxu0 %v2133
        %2626 = vmatprep.subr.bf16.mxu0 %v2130
        %2627 = vmatpush1.bf16.msra.mxu0 %v2129
        %2628 = vmatprep.subr.bf16.mxu0 %v2126
        %2629 = vmatpush1.bf16.msra.mxu0 %v2125
        %2630 = vmatprep.subr.bf16.mxu0 %v2122
        %2631 = vmatpush1.bf16.msra.mxu0 %v2121
        %2632 = vmatprep.subr.bf16.mxu0 %v2118
        %2633 = vmatpush1.bf16.msra.mxu0 %v2117
        %2634 = vmatprep.subr.bf16.mxu0 %v2178
        %2635 = vmatpush2.bf16.msra.mxu0 %v2177
        %2636 = vmatprep.subr.bf16.mxu0 %v2174
        %2637 = vmatpush2.bf16.msra.mxu0 %v2173
        %2638 = vmatprep.subr.bf16.mxu0 %v2170
        %2639 = vmatpush2.bf16.msra.mxu0 %v2169
        %2640 = vmatprep.subr.bf16.mxu0 %v2166
        %2641 = vmatpush2.bf16.msra.mxu0 %v2165
        %2642 = vmatprep.subr.bf16.mxu0 %v2162
        %2643 = vmatpush2.bf16.msra.mxu0 %v2161
        %2644 = vmatprep.subr.bf16.mxu0 %v2158
        %2645 = vmatpush2.bf16.msra.mxu0 %v2157
        %2646 = vmatprep.subr.bf16.mxu0 %v2154
        %2647 = vmatpush2.bf16.msra.mxu0 %v2153
        %2648 = vmatprep.subr.bf16.mxu0 %v2150
        %2649 = vmatpush2.bf16.msra.mxu0 %v2149
        %2650 = vmatprep.mubr.bf16.mxu0 %v994
        %2651 = vmatmul.mubr.bf16.gmra.mxu0 %v993
        %v2652 = vpop.f32.mrf.mxu0
        %v2653 = vadd.f32 %v2600, %v2652
        %v2654 = vpop.f32.mrf.mxu0
        %v2655 = vadd.f32 %v2602, %v2654
        %v2656 = vpop.f32.mrf.mxu0
        %v2657 = vadd.f32 %v2604, %v2656
        %v2658 = vpop.f32.mrf.mxu0
        %v2659 = vadd.f32 %v2606, %v2658
        %2660 = vmatprep.mubr.bf16.mxu0 %v1002
        %2661 = vmatmul.mubr.bf16.gmra.mxu0 %v1001
        %v2662 = vpop.f32.mrf.mxu0
        %v2663 = vadd.f32 %v2610, %v2662
        %v2664 = vpop.f32.mrf.mxu0
        %v2665 = vadd.f32 %v2612, %v2664
        %v2666 = vpop.f32.mrf.mxu0
        %v2667 = vadd.f32 %v2614, %v2666
        %v2668 = vpop.f32.mrf.mxu0
        %v2669 = vadd.f32 %v2616, %v2668
        %2670 = vdwg.mxu0
        %2671 = vmatprep.subr.bf16.mxu0 %v2210
        %2672 = vmatpush1.bf16.msra.mxu0 %v2209
        %2673 = vmatprep.subr.bf16.mxu0 %v2206
        %2674 = vmatpush1.bf16.msra.mxu0 %v2205
        %2675 = vmatprep.subr.bf16.mxu0 %v2202
        %2676 = vmatpush1.bf16.msra.mxu0 %v2201
        %2677 = vmatprep.subr.bf16.mxu0 %v2198
        %2678 = vmatpush1.bf16.msra.mxu0 %v2197
        %2679 = vmatprep.subr.bf16.mxu0 %v2194
        %2680 = vmatpush1.bf16.msra.mxu0 %v2193
        %2681 = vmatprep.subr.bf16.mxu0 %v2190
        %2682 = vmatpush1.bf16.msra.mxu0 %v2189
        %2683 = vmatprep.subr.bf16.mxu0 %v2186
        %2684 = vmatpush1.bf16.msra.mxu0 %v2185
        %2685 = vmatprep.subr.bf16.mxu0 %v2182
        %2686 = vmatpush1.bf16.msra.mxu0 %v2181
        %2687 = vmatprep.subr.bf16.mxu0 %v2242
        %2688 = vmatpush2.bf16.msra.mxu0 %v2241
        %2689 = vmatprep.subr.bf16.mxu0 %v2238
        %2690 = vmatpush2.bf16.msra.mxu0 %v2237
        %2691 = vmatprep.subr.bf16.mxu0 %v2234
        %2692 = vmatpush2.bf16.msra.mxu0 %v2233
        %2693 = vmatprep.subr.bf16.mxu0 %v2230
        %2694 = vmatpush2.bf16.msra.mxu0 %v2229
        %2695 = vmatprep.subr.bf16.mxu0 %v2226
        %2696 = vmatpush2.bf16.msra.mxu0 %v2225
        %2697 = vmatprep.subr.bf16.mxu0 %v2222
        %2698 = vmatpush2.bf16.msra.mxu0 %v2221
        %2699 = vmatprep.subr.bf16.mxu0 %v2218
        %2700 = vmatpush2.bf16.msra.mxu0 %v2217
        %2701 = vmatprep.subr.bf16.mxu0 %v2214
        %2702 = vmatpush2.bf16.msra.mxu0 %v2213
        %2703 = vmatprep.mubr.bf16.mxu0 %v996
        %2704 = vmatmul.mubr.bf16.gmra.mxu0 %v995
        %v2705 = vpop.f32.mrf.mxu0
        %v2706 = vadd.f32 %v2653, %v2705
        %v2707 = vpop.f32.mrf.mxu0
        %v2708 = vadd.f32 %v2655, %v2707
        %v2709 = vpop.f32.mrf.mxu0
        %v2710 = vadd.f32 %v2657, %v2709
        %v2711 = vpop.f32.mrf.mxu0
        %v2712 = vadd.f32 %v2659, %v2711
        %2713 = vmatprep.mubr.bf16.mxu0 %v1004
        %2714 = vmatmul.mubr.bf16.gmra.mxu0 %v1003
        %v2715 = vpop.f32.mrf.mxu0
        %v2716 = vadd.f32 %v2663, %v2715
        %v2717 = vpop.f32.mrf.mxu0
        %v2718 = vadd.f32 %v2665, %v2717
        %v2719 = vpop.f32.mrf.mxu0
        %v2720 = vadd.f32 %v2667, %v2719
        %v2721 = vpop.f32.mrf.mxu0
        %v2722 = vadd.f32 %v2669, %v2721
        %2723 = vdwg.mxu0
        %2724 = vmatprep.subr.bf16.mxu0 %v2274
        %2725 = vmatpush1.bf16.msra.mxu0 %v2273
        %2726 = vmatprep.subr.bf16.mxu0 %v2270
        %2727 = vmatpush1.bf16.msra.mxu0 %v2269
        %2728 = vmatprep.subr.bf16.mxu0 %v2266
        %2729 = vmatpush1.bf16.msra.mxu0 %v2265
        %2730 = vmatprep.subr.bf16.mxu0 %v2262
        %2731 = vmatpush1.bf16.msra.mxu0 %v2261
        %2732 = vmatprep.subr.bf16.mxu0 %v2258
        %2733 = vmatpush1.bf16.msra.mxu0 %v2257
        %2734 = vmatprep.subr.bf16.mxu0 %v2254
        %2735 = vmatpush1.bf16.msra.mxu0 %v2253
        %2736 = vmatprep.subr.bf16.mxu0 %v2250
        %2737 = vmatpush1.bf16.msra.mxu0 %v2249
        %2738 = vmatprep.subr.bf16.mxu0 %v2246
        %2739 = vmatpush1.bf16.msra.mxu0 %v2245
        %2740 = vmatprep.subr.bf16.mxu0 %v2306
        %2741 = vmatpush2.bf16.msra.mxu0 %v2305
        %2742 = vmatprep.subr.bf16.mxu0 %v2302
        %2743 = vmatpush2.bf16.msra.mxu0 %v2301
        %2744 = vmatprep.subr.bf16.mxu0 %v2298
        %2745 = vmatpush2.bf16.msra.mxu0 %v2297
        %2746 = vmatprep.subr.bf16.mxu0 %v2294
        %2747 = vmatpush2.bf16.msra.mxu0 %v2293
        %2748 = vmatprep.subr.bf16.mxu0 %v2290
        %2749 = vmatpush2.bf16.msra.mxu0 %v2289
        %2750 = vmatprep.subr.bf16.mxu0 %v2286
        %2751 = vmatpush2.bf16.msra.mxu0 %v2285
        %2752 = vmatprep.subr.bf16.mxu0 %v2282
        %2753 = vmatpush2.bf16.msra.mxu0 %v2281
        %2754 = vmatprep.subr.bf16.mxu0 %v2278
        %2755 = vmatpush2.bf16.msra.mxu0 %v2277
        %2756 = vmatprep.mubr.bf16.mxu0 %v998
        %2757 = vmatmul.mubr.bf16.gmra.mxu0 %v997
        %v2758 = vpop.f32.mrf.mxu0
        %v2759 = vadd.f32 %v2706, %v2758
        %v2760 = vpop.f32.mrf.mxu0
        %v2761 = vadd.f32 %v2708, %v2760
        %v2762 = vpop.f32.mrf.mxu0
        %v2763 = vadd.f32 %v2710, %v2762
        %v2764 = vpop.f32.mrf.mxu0
        %v2765 = vadd.f32 %v2712, %v2764
        %2766 = vmatprep.mubr.bf16.mxu0 %v1006
        %2767 = vmatmul.mubr.bf16.gmra.mxu0 %v1005
        %v2768 = vpop.f32.mrf.mxu0
        %v2769 = vadd.f32 %v2716, %v2768
        %v2770 = vpop.f32.mrf.mxu0
        %v2771 = vadd.f32 %v2718, %v2770
        %v2772 = vpop.f32.mrf.mxu0
        %v2773 = vadd.f32 %v2720, %v2772
        %v2774 = vpop.f32.mrf.mxu0
        %v2775 = vadd.f32 %v2722, %v2774
        %2776 = vdwg.mxu0
        %2777 = vmatprep.subr.bf16.mxu0 %v2084
        %2778 = vmatpush1.bf16.msra.mxu0 %v2083
        %2779 = vmatprep.subr.bf16.mxu0 %v2080
        %2780 = vmatpush1.bf16.msra.mxu0 %v2079
        %2781 = vmatprep.subr.bf16.mxu0 %v2076
        %2782 = vmatpush1.bf16.msra.mxu0 %v2075
        %2783 = vmatprep.subr.bf16.mxu0 %v2072
        %2784 = vmatpush1.bf16.msra.mxu0 %v2071
        %2785 = vmatprep.subr.bf16.mxu0 %v2068
        %2786 = vmatpush1.bf16.msra.mxu0 %v2067
        %2787 = vmatprep.subr.bf16.mxu0 %v2064
        %2788 = vmatpush1.bf16.msra.mxu0 %v2063
        %2789 = vmatprep.subr.bf16.mxu0 %v2060
        %2790 = vmatpush1.bf16.msra.mxu0 %v2059
        %2791 = vmatprep.subr.bf16.mxu0 %v2056
        %2792 = vmatpush1.bf16.msra.mxu0 %v2055
        %2793 = vmatprep.subr.bf16.mxu0 %v2116
        %2794 = vmatpush2.bf16.msra.mxu0 %v2115
        %2795 = vmatprep.subr.bf16.mxu0 %v2112
        %2796 = vmatpush2.bf16.msra.mxu0 %v2111
        %2797 = vmatprep.subr.bf16.mxu0 %v2108
        %2798 = vmatpush2.bf16.msra.mxu0 %v2107
        %2799 = vmatprep.subr.bf16.mxu0 %v2104
        %2800 = vmatpush2.bf16.msra.mxu0 %v2103
        %2801 = vmatprep.subr.bf16.mxu0 %v2100
        %2802 = vmatpush2.bf16.msra.mxu0 %v2099
        %2803 = vmatprep.subr.bf16.mxu0 %v2096
        %2804 = vmatpush2.bf16.msra.mxu0 %v2095
        %2805 = vmatprep.subr.bf16.mxu0 %v2092
        %2806 = vmatpush2.bf16.msra.mxu0 %v2091
        %2807 = vmatprep.subr.bf16.mxu0 %v2088
        %2808 = vmatpush2.bf16.msra.mxu0 %v2087
        %2809 = vmatprep.mubr.bf16.mxu0 %v992
        %2810 = vmatmul.mubr.bf16.gmra.mxu0 %v991
        %v2811 = vpop.f32.mrf.mxu0
        %v2812 = vadd.f32 %v1276, %v2811
        %v2813 = vpop.f32.mrf.mxu0
        %v2814 = vadd.f32 %v1280, %v2813
        %v2815 = vpop.f32.mrf.mxu0
        %v2816 = vadd.f32 %v1276, %v2815
        %v2817 = vpop.f32.mrf.mxu0
        %v2818 = vadd.f32 %v1280, %v2817
        %2819 = vmatprep.mubr.bf16.mxu0 %v1000
        %2820 = vmatmul.mubr.bf16.gmra.mxu0 %v999
        %v2821 = vpop.f32.mrf.mxu0
        %v2822 = vadd.f32 %v1276, %v2821
        %v2823 = vpop.f32.mrf.mxu0
        %v2824 = vadd.f32 %v1280, %v2823
        %v2825 = vpop.f32.mrf.mxu0
        %v2826 = vadd.f32 %v1276, %v2825
        %v2827 = vpop.f32.mrf.mxu0
        %v2828 = vadd.f32 %v1280, %v2827
        %2829 = vdwg.mxu0
        %2830 = vmatprep.subr.bf16.mxu0 %v2148
        %2831 = vmatpush1.bf16.msra.mxu0 %v2147
        %2832 = vmatprep.subr.bf16.mxu0 %v2144
        %2833 = vmatpush1.bf16.msra.mxu0 %v2143
        %2834 = vmatprep.subr.bf16.mxu0 %v2140
        %2835 = vmatpush1.bf16.msra.mxu0 %v2139
        %2836 = vmatprep.subr.bf16.mxu0 %v2136
        %2837 = vmatpush1.bf16.msra.mxu0 %v2135
        %2838 = vmatprep.subr.bf16.mxu0 %v2132
        %2839 = vmatpush1.bf16.msra.mxu0 %v2131
        %2840 = vmatprep.subr.bf16.mxu0 %v2128
        %2841 = vmatpush1.bf16.msra.mxu0 %v2127
        %2842 = vmatprep.subr.bf16.mxu0 %v2124
        %2843 = vmatpush1.bf16.msra.mxu0 %v2123
        %2844 = vmatprep.subr.bf16.mxu0 %v2120
        %2845 = vmatpush1.bf16.msra.mxu0 %v2119
        %2846 = vmatprep.subr.bf16.mxu0 %v2180
        %2847 = vmatpush2.bf16.msra.mxu0 %v2179
        %2848 = vmatprep.subr.bf16.mxu0 %v2176
        %2849 = vmatpush2.bf16.msra.mxu0 %v2175
        %2850 = vmatprep.subr.bf16.mxu0 %v2172
        %2851 = vmatpush2.bf16.msra.mxu0 %v2171
        %2852 = vmatprep.subr.bf16.mxu0 %v2168
        %2853 = vmatpush2.bf16.msra.mxu0 %v2167
        %2854 = vmatprep.subr.bf16.mxu0 %v2164
        %2855 = vmatpush2.bf16.msra.mxu0 %v2163
        %2856 = vmatprep.subr.bf16.mxu0 %v2160
        %2857 = vmatpush2.bf16.msra.mxu0 %v2159
        %2858 = vmatprep.subr.bf16.mxu0 %v2156
        %2859 = vmatpush2.bf16.msra.mxu0 %v2155
        %2860 = vmatprep.subr.bf16.mxu0 %v2152
        %2861 = vmatpush2.bf16.msra.mxu0 %v2151
        %2862 = vmatprep.mubr.bf16.mxu0 %v994
        %2863 = vmatmul.mubr.bf16.gmra.mxu0 %v993
        %v2864 = vpop.f32.mrf.mxu0
        %v2865 = vadd.f32 %v2812, %v2864
        %v2866 = vpop.f32.mrf.mxu0
        %v2867 = vadd.f32 %v2814, %v2866
        %v2868 = vpop.f32.mrf.mxu0
        %v2869 = vadd.f32 %v2816, %v2868
        %v2870 = vpop.f32.mrf.mxu0
        %v2871 = vadd.f32 %v2818, %v2870
        %2872 = vmatprep.mubr.bf16.mxu0 %v1002
        %2873 = vmatmul.mubr.bf16.gmra.mxu0 %v1001
        %v2874 = vpop.f32.mrf.mxu0
        %v2875 = vadd.f32 %v2822, %v2874
        %v2876 = vpop.f32.mrf.mxu0
        %v2877 = vadd.f32 %v2824, %v2876
        %v2878 = vpop.f32.mrf.mxu0
        %v2879 = vadd.f32 %v2826, %v2878
        %v2880 = vpop.f32.mrf.mxu0
        %v2881 = vadd.f32 %v2828, %v2880
        %2882 = vdwg.mxu0
        %2883 = vmatprep.subr.bf16.mxu0 %v2212
        %2884 = vmatpush1.bf16.msra.mxu0 %v2211
        %2885 = vmatprep.subr.bf16.mxu0 %v2208
        %2886 = vmatpush1.bf16.msra.mxu0 %v2207
        %2887 = vmatprep.subr.bf16.mxu0 %v2204
        %2888 = vmatpush1.bf16.msra.mxu0 %v2203
        %2889 = vmatprep.subr.bf16.mxu0 %v2200
        %2890 = vmatpush1.bf16.msra.mxu0 %v2199
        %2891 = vmatprep.subr.bf16.mxu0 %v2196
        %2892 = vmatpush1.bf16.msra.mxu0 %v2195
        %2893 = vmatprep.subr.bf16.mxu0 %v2192
        %2894 = vmatpush1.bf16.msra.mxu0 %v2191
        %2895 = vmatprep.subr.bf16.mxu0 %v2188
        %2896 = vmatpush1.bf16.msra.mxu0 %v2187
        %2897 = vmatprep.subr.bf16.mxu0 %v2184
        %2898 = vmatpush1.bf16.msra.mxu0 %v2183
        %2899 = vmatprep.subr.bf16.mxu0 %v2244
        %2900 = vmatpush2.bf16.msra.mxu0 %v2243
        %2901 = vmatprep.subr.bf16.mxu0 %v2240
        %2902 = vmatpush2.bf16.msra.mxu0 %v2239
        %2903 = vmatprep.subr.bf16.mxu0 %v2236
        %2904 = vmatpush2.bf16.msra.mxu0 %v2235
        %2905 = vmatprep.subr.bf16.mxu0 %v2232
        %2906 = vmatpush2.bf16.msra.mxu0 %v2231
        %2907 = vmatprep.subr.bf16.mxu0 %v2228
        %2908 = vmatpush2.bf16.msra.mxu0 %v2227
        %2909 = vmatprep.subr.bf16.mxu0 %v2224
        %2910 = vmatpush2.bf16.msra.mxu0 %v2223
        %2911 = vmatprep.subr.bf16.mxu0 %v2220
        %2912 = vmatpush2.bf16.msra.mxu0 %v2219
        %2913 = vmatprep.subr.bf16.mxu0 %v2216
        %2914 = vmatpush2.bf16.msra.mxu0 %v2215
        %2915 = vmatprep.mubr.bf16.mxu0 %v996
        %2916 = vmatmul.mubr.bf16.gmra.mxu0 %v995
        %v2917 = vpop.f32.mrf.mxu0
        %v2918 = vadd.f32 %v2865, %v2917
        %v2919 = vpop.f32.mrf.mxu0
        %v2920 = vadd.f32 %v2867, %v2919
        %v2921 = vpop.f32.mrf.mxu0
        %v2922 = vadd.f32 %v2869, %v2921
        %v2923 = vpop.f32.mrf.mxu0
        %v2924 = vadd.f32 %v2871, %v2923
        %2925 = vmatprep.mubr.bf16.mxu0 %v1004
        %2926 = vmatmul.mubr.bf16.gmra.mxu0 %v1003
        %v2927 = vpop.f32.mrf.mxu0
        %v2928 = vadd.f32 %v2875, %v2927
        %v2929 = vpop.f32.mrf.mxu0
        %v2930 = vadd.f32 %v2877, %v2929
        %v2931 = vpop.f32.mrf.mxu0
        %v2932 = vadd.f32 %v2879, %v2931
        %v2933 = vpop.f32.mrf.mxu0
        %v2934 = vadd.f32 %v2881, %v2933
        %2935 = vdwg.mxu0
        %2936 = vmatprep.subr.bf16.mxu0 %v2276
        %2937 = vmatpush1.bf16.msra.mxu0 %v2275
        %2938 = vmatprep.subr.bf16.mxu0 %v2272
        %2939 = vmatpush1.bf16.msra.mxu0 %v2271
        %2940 = vmatprep.subr.bf16.mxu0 %v2268
        %2941 = vmatpush1.bf16.msra.mxu0 %v2267
        %2942 = vmatprep.subr.bf16.mxu0 %v2264
        %2943 = vmatpush1.bf16.msra.mxu0 %v2263
        %2944 = vmatprep.subr.bf16.mxu0 %v2260
        %2945 = vmatpush1.bf16.msra.mxu0 %v2259
        %2946 = vmatprep.subr.bf16.mxu0 %v2256
        %2947 = vmatpush1.bf16.msra.mxu0 %v2255
        %2948 = vmatprep.subr.bf16.mxu0 %v2252
        %2949 = vmatpush1.bf16.msra.mxu0 %v2251
        %2950 = vmatprep.subr.bf16.mxu0 %v2248
        %2951 = vmatpush1.bf16.msra.mxu0 %v2247
        %2952 = vmatprep.subr.bf16.mxu0 %v2308
        %2953 = vmatpush2.bf16.msra.mxu0 %v2307
        %2954 = vmatprep.subr.bf16.mxu0 %v2304
        %2955 = vmatpush2.bf16.msra.mxu0 %v2303
        %2956 = vmatprep.subr.bf16.mxu0 %v2300
        %2957 = vmatpush2.bf16.msra.mxu0 %v2299
        %2958 = vmatprep.subr.bf16.mxu0 %v2296
        %2959 = vmatpush2.bf16.msra.mxu0 %v2295
        %2960 = vmatprep.subr.bf16.mxu0 %v2292
        %2961 = vmatpush2.bf16.msra.mxu0 %v2291
        %2962 = vmatprep.subr.bf16.mxu0 %v2288
        %2963 = vmatpush2.bf16.msra.mxu0 %v2287
        %2964 = vmatprep.subr.bf16.mxu0 %v2284
        %2965 = vmatpush2.bf16.msra.mxu0 %v2283
        %2966 = vmatprep.subr.bf16.mxu0 %v2280
        %2967 = vmatpush2.bf16.msra.mxu0 %v2279
        %2968 = vmatprep.mubr.bf16.mxu0 %v998
        %2969 = vmatmul.mubr.bf16.gmra.mxu0 %v997
        %v2970 = vpop.f32.mrf.mxu0
        %v2971 = vadd.f32 %v2918, %v2970
        %v2972 = vpop.f32.mrf.mxu0
        %v2973 = vadd.f32 %v2920, %v2972
        %v2974 = vpop.f32.mrf.mxu0
        %v2975 = vadd.f32 %v2922, %v2974
        %v2976 = vpop.f32.mrf.mxu0
        %v2977 = vadd.f32 %v2924, %v2976
        %2978 = vmatprep.mubr.bf16.mxu0 %v1006
        %2979 = vmatmul.mubr.bf16.gmra.mxu0 %v1005
        %v2980 = vpop.f32.mrf.mxu0
        %v2981 = vadd.f32 %v2928, %v2980
        %v2982 = vpop.f32.mrf.mxu0
        %v2983 = vadd.f32 %v2930, %v2982
        %v2984 = vpop.f32.mrf.mxu0
        %v2985 = vadd.f32 %v2932, %v2984
        %v2986 = vpop.f32.mrf.mxu0
        %v2987 = vadd.f32 %v2934, %v2986
        %2988 = vdwg.mxu0
        %v2989 = vmax.f32 %v2759, 0.0
        %v2990 = vmax.f32 %v2761, 0.0
        %v2991 = vmax.f32 %v2971, 0.0
        %v2992 = vmax.f32 %v2973, 0.0
        %v2993 = vmax.f32 %v2763, 0.0
        %v2994 = vmax.f32 %v2765, 0.0
        %v2995 = vmax.f32 %v2975, 0.0
        %v2996 = vmax.f32 %v2977, 0.0
        %v2997 = vmax.f32 %v2769, 0.0
        %v2998 = vmax.f32 %v2771, 0.0
        %v2999 = vmax.f32 %v2981, 0.0
        %v3000 = vmax.f32 %v2983, 0.0
        %v3001 = vmax.f32 %v2773, 0.0
        %v3002 = vmax.f32 %v2775, 0.0
        %v3003 = vmax.f32 %v2985, 0.0
        %v3004 = vmax.f32 %v2987, 0.0
        %v3005 = vld [vmem:[%s5] sm:$0xf]
        %v3007 = vlaneseq
        %v3008 = vshrl.u32 %v3007, 7
        %v3009 = vsub.s32 0, %v3008
        %v3010 = vrot.slane %v3005, %v3009
        %v3011 = vlaneseq
        %v3012 = vshrl.u32 %v3011, 7
        %v3013 = vsub.s32 1, %v3012
        %v3014 = vrot.slane %v3005, %v3013
        %v3015 = vlaneseq
        %v3016 = vshrl.u32 %v3015, 7
        %v3017 = vsub.s32 2, %v3016
        %v3018 = vrot.slane %v3005, %v3017
        %v3019 = vlaneseq
        %v3020 = vshrl.u32 %v3019, 7
        %v3021 = vsub.s32 3, %v3020
        %v3022 = vrot.slane %v3005, %v3021
        %v3027 = vmul.f32 %v2989, %v3010
        %v3028 = vmul.f32 %v2990, %v3014
        %v3029 = vmul.f32 %v2991, %v3018
        %v3030 = vmul.f32 %v2992, %v3022
        %v3031 = vmul.f32 %v2993, %v3010
        %v3032 = vmul.f32 %v2994, %v3014
        %v3033 = vmul.f32 %v2995, %v3018
        %v3034 = vmul.f32 %v2996, %v3022
        %v3035 = vmul.f32 %v2997, %v3010
        %v3036 = vmul.f32 %v2998, %v3014
        %v3037 = vmul.f32 %v2999, %v3018
        %v3038 = vmul.f32 %v3000, %v3022
        %v3039 = vmul.f32 %v3001, %v3010
        %v3040 = vmul.f32 %v3002, %v3014
        %v3041 = vmul.f32 %v3003, %v3018
        %v3042 = vmul.f32 %v3004, %v3022
        %v3043 = vadd.f32 %v3027, %v3028
        %v3044 = vadd.f32 %v3043, %v3029
        %v3045 = vadd.f32 %v3044, %v3030
        %3046 = vadd.xlane.f32.xlu0 %v3045
        %v3047 = vpop.xlane.xlu0 %3046
        %v3048 = vadd.f32 %v3031, %v3032
        %v3049 = vadd.f32 %v3048, %v3033
        %v3050 = vadd.f32 %v3049, %v3034
        %3051 = vadd.xlane.f32.xlu0 %v3050
        %v3052 = vpop.xlane.xlu0 %3051
        %v3053 = vadd.f32 %v3035, %v3036
        %v3054 = vadd.f32 %v3053, %v3037
        %v3055 = vadd.f32 %v3054, %v3038
        %3056 = vadd.xlane.f32.xlu0 %v3055
        %v3057 = vpop.xlane.xlu0 %3056
        %v3058 = vadd.f32 %v3039, %v3040
        %v3059 = vadd.f32 %v3058, %v3041
        %v3060 = vadd.f32 %v3059, %v3042
        %3061 = vadd.xlane.f32.xlu0 %v3060
        %v3062 = vpop.xlane.xlu0 %3061
        %s3063 = sld [smem:[#allocation2]]
        %v3064 = vstv %s3063
        %v3065 = vadd.f32 %v3047, %v3064
        %v3066 = vadd.f32 %v3052, %v3064
        %v3067 = vadd.f32 %v3057, %v3064
        %v3068 = vadd.f32 %v3062, %v3064
        %3069 = vxpose.xlu0.b32.start [1/16] %v3065, 128
        %3070 = vxpose.xlu0.b32.cont [2/16] %v3066, 128
        %3071 = vxpose.xlu0.b32.cont [3/16] %v3067, 128
        %3072 = vxpose.xlu0.b32.cont [4/16] %v3068, 128
        %3073 = vxpose.xlu0.b32.cont [5/16] 0.0, 128
        %3074 = vxpose.xlu0.b32.cont [6/16] 0.0, 128
        %3075 = vxpose.xlu0.b32.cont [7/16] 0.0, 128
        %3076 = vxpose.xlu0.b32.cont [8/16] 0.0, 128
        %3077 = vxpose.xlu0.b32.cont [9/16] 0.0, 128
        %3078 = vxpose.xlu0.b32.cont [10/16] 0.0, 128
        %3079 = vxpose.xlu0.b32.cont [11/16] 0.0, 128
        %3080 = vxpose.xlu0.b32.cont [12/16] 0.0, 128
        %3081 = vxpose.xlu0.b32.cont [13/16] 0.0, 128
        %3082 = vxpose.xlu0.b32.cont [14/16] 0.0, 128
        %3083 = vxpose.xlu0.b32.cont [15/16] 0.0, 128
        %3084 = vxpose.xlu0.b32.end [16/16] 0.0, 128
        %v3085 = vpop.trf.xlu0
        %v3086 = vpop.trf.xlu0
        %v3087 = vpop.trf.xlu0
        %v3088 = vpop.trf.xlu0
        %v3089 = vpop.trf.xlu0
        %v3090 = vpop.trf.xlu0
        %v3091 = vpop.trf.xlu0
        %v3092 = vpop.trf.xlu0
        %v3093 = vpop.trf.xlu0
        %v3094 = vpop.trf.xlu0
        %v3095 = vpop.trf.xlu0
        %v3096 = vpop.trf.xlu0
        %v3097 = vpop.trf.xlu0
        %v3098 = vpop.trf.xlu0
        %v3099 = vpop.trf.xlu0
        %v3100 = vpop.trf.xlu0
        %vm3101 = vcmask 253952
        %3102 = vst.msk [vmem:[%s292] sm:$0x1] %vm3101, %v3085
        %p3103 = scmp.lt.s32.totalorder %s20, 1
        %s3104 = scalar_select %p3103, %s20, 1
        %s3105 = scalar_lea.vmem %s7, %s3104
        // Predicated region
        $region53: #{forward.1} parent=47 // pred_check
          %p3106 = pneg %p190
        $region54: #{forward.1} parent=47 // pred_check_branch
          %3108 = sbr.rel (%p3106) target = $region56
        $region55: #{forward.1} parent=47 // pred_region
          _
        $region56: #{forward.1} parent=47 // pred_fallthru
          _
      $region48: #{forward.1} parent=5 // pred_fallthru
        _
      %p3109 = scmp.le.s32.totalorder 2, %s15
      // Predicated region
      $region57: #{forward.1} parent=5 // pred_check
        %p3110 = pneg %p3109
      $region58: #{forward.1} parent=5 // pred_check_branch
        %3112 = sbr.rel (%p3110) target = $region60
      $region59: #{forward.1} parent=5 // pred_region
        %s3113 = ssub.s32 %s15, 2
        // Predicated region
        $region61: #{forward.1} parent=59 // pred_check
          %p3114 = pneg %p196
        $region62: #{forward.1} parent=59 // pred_check_branch
          %3116 = sbr.rel (%p3114) target = $region64
        $region63: #{forward.1} parent=59 // pred_region
          %p3117 = scmp.lt.s32.totalorder %s21, 1
          %s3118 = scalar_select %p3117, %s21, 1
          %s3119 = scalar_lea.vmem %s7, %s3118
        $region64: #{forward.1} parent=59 // pred_fallthru
          _
      $region60: #{forward.1} parent=5 // pred_fallthru
        _
    $region6: #{forward.1} parent=1 // loop_footer
      %s19 = sadd.s32 1, %s15
    $region7: #{forward.1} parent=1 // loop_footer_branch
      %14 = sbr.rel target = $region3
    $region8: #{forward.1} parent=1 // loop_exit
      _
    %3120 = vsyncpa [#allocation4], 1
    %s3121 = scalar_lea.sflag [#allocation4], 1
    %3122 = vsyncpa %s3121, 1

</llo_original>
